<compile_context>
chip_gen: v5e
topology: v5e:2x2
jax: 0.10.0
libtpu: 0.0.40
codegen_flags: <defaults>
</compile_context>

<pallas_src>
import numpy as np
import jax
import jax.numpy as jnp
from jax import lax
from jax.experimental import pallas as pl
from jax.experimental.pallas import tpu as pltpu

B = 2          # batch for the demo
L_IN = 18      # input length -> flatten size after the pools is 20*4 = 80
S1 = 32        # padded per-sample row stride, stages with 18/17 valid rows
S2 = 16        # padded per-sample row stride after the stride-2 pool (8 rows)

# ---------------------------------------------------------------------------
# Weight slab layout: every parameter block starts at an 8-aligned row offset
# of ONE (SLAB_ROWS, 128) f32 array -> a single input DMA instead of 14.
# ---------------------------------------------------------------------------
_SLAB_SPEC = [
    ("w1", 3, 6),                                     # conv1 taps (tap-major rows)
    ("b1", 1, 6),
    ("w2p", 6, 12), ("w2c", 6, 12), ("w2n", 6, 12),   # conv2 taps (Cin, Cout)
    ("b2", 1, 12),
    ("w3p", 12, 20), ("w3c", 12, 20), ("w3n", 12, 20),
    ("b3", 1, 20),
    ("fc4w0", 20, 60), ("fc4w1", 20, 60),             # fc4 split by pool3 window
    ("fc4w2", 20, 60), ("fc4w3", 20, 60),
    ("fc4b", 1, 60),
    ("fc5w", 60, 50), ("fc5b", 1, 50),
    ("fc6w", 50, 25), ("fc6b", 1, 25),
    ("outw", 25, 3), ("outb", 1, 3),
]
_SLAB = {}
_row = 0
for _name, _rows, _cols in _SLAB_SPEC:
    _SLAB[_name] = (_row, _rows, _cols)
    _row = ((_row + _rows + 7) // 8) * 8              # 8-align every block
_SLAB_ROWS = _row                                     # = 384 (192 KiB f32 slab)


def _roll(x, shift):
    """Whole-tile sublane rotation (XLU); shift made non-negative."""
    return pltpu.roll(x, shift % x.shape[0], axis=0)


# ---------------------------------------------------------------------------
# Pallas kernel: whole forward pass for one batch block of tb samples.
# Activations are sample-major stacked (tb*stride, C) tiles; pad rows between
# samples are kept at zero so roll-based 'same' padding never leaks.
# ---------------------------------------------------------------------------
def cnn_kernel(x_ref, slab_ref, o_ref, s2_ref, s3_ref):
    tb = x_ref.shape[0] // S1

    def blk(name):
        off, rows, cols = _SLAB[name]
        return slab_ref[pl.ds(off, rows), pl.ds(0, cols)]

    # ---- conv1 (Cin=1): VPU broadcast taps + ReLU ---------------------------
    # Input pad rows are zero, so +/-1 rolls give correct 'same' padding.
    h0 = x_ref[...]                                            # (tb*S1, 1)
    off1, _, c1 = _SLAB["w1"]
    w1p = slab_ref[pl.ds(off1 + 0, 1), pl.ds(0, c1)]           # (1, 6)
    w1c = slab_ref[pl.ds(off1 + 1, 1), pl.ds(0, c1)]
    w1n = slab_ref[pl.ds(off1 + 2, 1), pl.ds(0, c1)]
    h = _roll(h0, 1) * w1p + h0 * w1c + _roll(h0, -1) * w1n + blk("b1")
    h = jnp.maximum(h, 0.0)                                    # (tb*S1, 6)

    # ---- pool1: kernel=2, stride=1 (valid per-sample rows 0..16) ------------
    h = jnp.maximum(h, _roll(h, -1))

    # Re-zero pad rows so the conv2 rolls see zeros at sample boundaries.
    row = lax.broadcasted_iota(jnp.int32, h.shape, 0)
    h = jnp.where((row % S1) < 17, h, 0.0)

    # ---- conv2: split-K over the 3 taps (one batched matmul per tap) --------
    h = (jnp.dot(_roll(h, 1), blk("w2p"), preferred_element_type=jnp.float32)
         + jnp.dot(h, blk("w2c"), preferred_element_type=jnp.float32)
         + jnp.dot(_roll(h, -1), blk("w2n"), preferred_element_type=jnp.float32)
         + blk("b2"))
    h = jnp.maximum(h, 0.0)                                    # (tb*S1, 12)

    # ---- pool2: kernel=3, stride=2 ------------------------------------------
    # 3-tap max in registers, then ONE aligned whole-tile stride-2 read that
    # decimates the per-sample stride S1=32 down to S2=16 (8 valid rows).
    m = jnp.maximum(jnp.maximum(h, _roll(h, -1)), _roll(h, -2))
    s2_ref[...] = m
    h = s2_ref[pl.ds(0, tb * S2, stride=2), :]                 # (tb*S2, 12)

    # Zero decimation junk so the conv3 rolls see zeros at sample boundaries.
    row = lax.broadcasted_iota(jnp.int32, h.shape, 0)
    h = jnp.where((row % S2) < 8, h, 0.0)

    # ---- conv3: split-K over the 3 taps --------------------------------------
    h = (jnp.dot(_roll(h, 1), blk("w3p"), preferred_element_type=jnp.float32)
         + jnp.dot(h, blk("w3c"), preferred_element_type=jnp.float32)
         + jnp.dot(_roll(h, -1), blk("w3n"), preferred_element_type=jnp.float32)
         + blk("b3"))
    h = jnp.maximum(h, 0.0)                                    # (tb*S2, 20)

    # ---- pool3 (k=2,s=2) fused with flatten + fc4 (split-K over windows) ----
    # Each window l: max of per-sample rows 2l / 2l+1 via aligned strided reads
    # -> (tb, 20), accumulated straight into the fc4 matmul.  No 80-lane
    # concatenate, no flatten scratch round trip, no channel-major perm.
    s3_ref[...] = h
    acc = jnp.zeros((tb, 60), jnp.float32)
    for l in range(4):
        win = jnp.maximum(s3_ref[pl.ds(2 * l, tb, stride=S2), :],
                          s3_ref[pl.ds(2 * l + 1, tb, stride=S2), :])   # (tb, 20)
        acc = acc + jnp.dot(win, blk(f"fc4w{l}"),
                            preferred_element_type=jnp.float32)
    h = jnp.maximum(acc + blk("fc4b"), 0.0)                    # (tb, 60)

    # ---- batched FC stack + single dense output store ------------------------
    h = jnp.maximum(jnp.dot(h, blk("fc5w"), preferred_element_type=jnp.float32)
                    + blk("fc5b"), 0.0)                        # (tb, 50)
    h = jnp.maximum(jnp.dot(h, blk("fc6w"), preferred_element_type=jnp.float32)
                    + blk("fc6b"), 0.0)                        # (tb, 25)
    o_ref[...] = (jnp.dot(h, blk("outw"), preferred_element_type=jnp.float32)
                  + blk("outb"))                               # (tb, 3)


# ---------------------------------------------------------------------------
# Host-side weight packing into the single slab.
# ---------------------------------------------------------------------------
def _pack_weight_slab(p):
    vals = {
        "w1":  p["conv1_w"][:, 0, :].T,                        # (3, 6)
        "b1":  p["conv1_b"].reshape(1, -1),
        "w2p": p["conv2_w"][:, :, 0].T,                        # (6, 12)
        "w2c": p["conv2_w"][:, :, 1].T,
        "w2n": p["conv2_w"][:, :, 2].T,
        "b2":  p["conv2_b"].reshape(1, -1),
        "w3p": p["conv3_w"][:, :, 0].T,                        # (12, 20)
        "w3c": p["conv3_w"][:, :, 1].T,
        "w3n": p["conv3_w"][:, :, 2].T,
        "b3":  p["conv3_b"].reshape(1, -1),
        # torch flatten index is c*4 + l (channel-major); per-window slice:
        "fc4w0": p["fc4_w"][:, 0::4].T,                        # (20, 60)
        "fc4w1": p["fc4_w"][:, 1::4].T,
        "fc4w2": p["fc4_w"][:, 2::4].T,
        "fc4w3": p["fc4_w"][:, 3::4].T,
        "fc4b": p["fc4_b"].reshape(1, -1),
        "fc5w": p["fc5_w"].T, "fc5b": p["fc5_b"].reshape(1, -1),
        "fc6w": p["fc6_w"].T, "fc6b": p["fc6_b"].reshape(1, -1),
        "outw": p["out_w"].T, "outb": p["out_b"].reshape(1, -1),
    }
    slab = jnp.zeros((_SLAB_ROWS, 128), jnp.float32)
    for name, (off, rows, cols) in _SLAB.items():
        v = jnp.asarray(vals[name], jnp.float32)
        slab = slab.at[off:off + rows, 0:cols].set(v)
    return slab


# ---------------------------------------------------------------------------
# Wrapper: host-side stacking/padding + pallas_call.
# ---------------------------------------------------------------------------
def cnn_forward_pallas(x_ncl, params, batch_block=None):
    """x_ncl: (B, 1, 18) float32 (PyTorch NCL layout)."""
    nb = x_ncl.shape[0]
    tb = nb if batch_block is None else batch_block
    assert nb % tb == 0, "batch must divide evenly into batch blocks"
    if tb != nb:
        assert tb % 8 == 0, "multi-block runs need tb % 8 == 0 for the (tb,3) output tile"
    grid = (nb // tb,)

    # Sample-major stacked input with per-sample stride padded to S1 rows
    # (zeros between samples) -> the DMA delivers exactly the kernel layout.
    x_lc = jnp.transpose(x_ncl, (0, 2, 1))                     # (nb, 18, 1)
    x_stack = jnp.pad(x_lc, ((0, 0), (0, S1 - L_IN), (0, 0))).reshape(nb * S1, 1)

    slab = _pack_weight_slab(params)                           # (SLAB_ROWS, 128)

    return pl.pallas_call(
        cnn_kernel,
        out_shape=jax.ShapeDtypeStruct((nb, 3), jnp.float32),
        grid_spec=pltpu.PrefetchScalarGridSpec(
            num_scalar_prefetch=0,
            grid=grid,
            in_specs=[pl.BlockSpec((tb * S1, 1), lambda i: (i, 0)),
                      pl.BlockSpec((_SLAB_ROWS, 128), lambda i: (0, 0))],
            out_specs=pl.BlockSpec((tb, 3), lambda i: (i, 0)),
            scratch_shapes=[pltpu.VMEM((tb * S1, 12), jnp.float32),   # pool2 staging
                            pltpu.VMEM((tb * S2, 20), jnp.float32)]), # pool3 staging
        compiler_params=pltpu.CompilerParams(
            dimension_semantics=("parallel",)),
    )(x_stack, slab)


# ---------------------------------------------------------------------------
# Deterministic parameter init (matches the torch module shapes).
# ---------------------------------------------------------------------------
def init_params(key):
    ks = jax.random.split(key, 14)

    def u(k, shape, fan_in):
        b = 1.0 / np.sqrt(fan_in)
        return jax.random.uniform(k, shape, jnp.float32, -b, b)

    return {
        "conv1_w": u(ks[0], (6, 1, 3), 1 * 3),    "conv1_b": u(ks[1], (6,), 1 * 3),
        "conv2_w": u(ks[2], (12, 6, 3), 6 * 3),   "conv2_b": u(ks[3], (12,), 6 * 3),
        "conv3_w": u(ks[4], (20, 12, 3), 12 * 3), "conv3_b": u(ks[5], (20,), 12 * 3),
        "fc4_w": u(ks[6], (60, 80), 80),          "fc4_b": u(ks[7], (60,), 80),
        "fc5_w": u(ks[8], (50, 60), 60),          "fc5_b": u(ks[9], (50,), 60),
        "fc6_w": u(ks[10], (25, 50), 50),         "fc6_b": u(ks[11], (25,), 50),
        "out_w": u(ks[12], (3, 25), 25),          "out_b": u(ks[13], (3,), 25),
    }


# ---------------------------------------------------------------------------
# Pure-JAX reference (mirrors the PyTorch forward exactly, NCL layout).
# ---------------------------------------------------------------------------
def ref_forward(x, p):
    def conv1d(h, w, b):                     # h: (B,Cin,L) ; w: (Cout,Cin,3)
        L = h.shape[2]
        hp = jnp.pad(h, ((0, 0), (0, 0), (1, 1)))
        y = sum(jnp.einsum("oc,bcl->bol", w[:, :, k], hp[:, :, k:k + L])
                for k in range(3))
        return y + b[None, :, None]

    def maxpool(h, kernel, stride):
        L = h.shape[2]
        Lo = (L - kernel) // stride + 1
        return jnp.stack([h[:, :, i * stride:i * stride + kernel].max(axis=2)
                          for i in range(Lo)], axis=2)

    relu = lambda v: jnp.maximum(v, 0.0)
    h = relu(conv1d(x, p["conv1_w"], p["conv1_b"]))
    h = maxpool(h, 2, 1)
    h = relu(conv1d(h, p["conv2_w"], p["conv2_b"]))
    h = maxpool(h, 3, 2)
    h = relu(conv1d(h, p["conv3_w"], p["conv3_b"]))
    h = maxpool(h, 2, 2)
    h = h.reshape(h.shape[0], -1)            # channel-major flatten -> (B, 80)
    h = relu(h @ p["fc4_w"].T + p["fc4_b"])
    h = relu(h @ p["fc5_w"].T + p["fc5_b"])
    h = relu(h @ p["fc6_w"].T + p["fc6_b"])
    return h @ p["out_w"].T + p["out_b"]


if __name__ == "__main__":
    key = jax.random.PRNGKey(0)
    kx, kp = jax.random.split(key)
    x = jax.random.normal(kx, (B, 1, L_IN), dtype=jnp.float32)   # NCL like torch
    params = init_params(kp)

    fwd = jax.jit(cnn_forward_pallas)
    out = jax.block_until_ready(fwd(x, params))

    ref = jax.block_until_ready(ref_forward(x, params))
    if not np.allclose(np.asarray(out), np.asarray(ref), atol=1e-4, rtol=1e-4):
        raise AssertionError("Pallas kernel output mismatch vs reference")
    print("KERNEL_OK")
</pallas_src>

<mosaic_0001>
module attributes {stable_mosaic.version = 11 : i64} {
  func.func @cnn_kernel(%arg0: i32, %arg1: memref<64x1xf32, #tpu.memory_space<vmem>>, %arg2: memref<384x128xf32, #tpu.memory_space<vmem>>, %arg3: memref<2x3xf32, #tpu.memory_space<vmem>>, %arg4: memref<64x12xf32, #tpu.memory_space<vmem>>, %arg5: memref<32x20xf32, #tpu.memory_space<vmem>>) attributes {dimension_semantics = [#tpu.dimension_semantics<parallel>], iteration_bounds = array<i64: 1>, scalar_prefetch = 0 : i64, scratch_operands = 2 : i64, tpu.core_type = #tpu.core_type<tc>, window_params = [{transform_indices = @transform_0, window_bounds = array<i64: 64, 1>}, {pipeline_mode = #tpu.pipeline_mode<synchronous>, transform_indices = @transform_1, window_bounds = array<i64: 384, 128>}, {transform_indices = @transform_2, window_bounds = array<i64: 2, 3>}]} {
    %c0 = arith.constant 0 : index
    %c0_0 = arith.constant 0 : index
    %0 = vector.load %arg1[%c0, %c0_0] : memref<64x1xf32, #tpu.memory_space<vmem>>, vector<64x1xf32>
    %c0_1 = arith.constant 0 : index
    %c0_2 = arith.constant 0 : index
    %1 = vector.load %arg2[%c0_1, %c0_2] : memref<384x128xf32, #tpu.memory_space<vmem>>, vector<1x6xf32>
    %c1 = arith.constant 1 : index
    %c0_3 = arith.constant 0 : index
    %2 = vector.load %arg2[%c1, %c0_3] : memref<384x128xf32, #tpu.memory_space<vmem>>, vector<1x6xf32>
    %c2 = arith.constant 2 : index
    %c0_4 = arith.constant 0 : index
    %3 = vector.load %arg2[%c2, %c0_4] : memref<384x128xf32, #tpu.memory_space<vmem>>, vector<1x6xf32>
    %c1_i32 = arith.constant 1 : i32
    %4 = tpu.dynamic_rotate %0 by %c1_i32 dim 0 : vector<64x1xf32>, i32 -> vector<64x1xf32>
    %5 = vector.broadcast %4 : vector<64x1xf32> to vector<64x6xf32>
    %6 = vector.broadcast %1 : vector<1x6xf32> to vector<64x6xf32>
    %7 = arith.mulf %5, %6 : vector<64x6xf32>
    %8 = vector.broadcast %0 : vector<64x1xf32> to vector<64x6xf32>
    %9 = vector.broadcast %2 : vector<1x6xf32> to vector<64x6xf32>
    %10 = arith.mulf %8, %9 : vector<64x6xf32>
    %11 = arith.addf %7, %10 : vector<64x6xf32>
    %c63_i32 = arith.constant 63 : i32
    %12 = tpu.dynamic_rotate %0 by %c63_i32 dim 0 : vector<64x1xf32>, i32 -> vector<64x1xf32>
    %13 = vector.broadcast %12 : vector<64x1xf32> to vector<64x6xf32>
    %14 = vector.broadcast %3 : vector<1x6xf32> to vector<64x6xf32>
    %15 = arith.mulf %13, %14 : vector<64x6xf32>
    %16 = arith.addf %11, %15 : vector<64x6xf32>
    %c8 = arith.constant 8 : index
    %c0_5 = arith.constant 0 : index
    %17 = vector.load %arg2[%c8, %c0_5] : memref<384x128xf32, #tpu.memory_space<vmem>>, vector<1x6xf32>
    %18 = vector.broadcast %17 : vector<1x6xf32> to vector<64x6xf32>
    %19 = arith.addf %16, %18 : vector<64x6xf32>
    %cst = arith.constant 0.000000e+00 : f32
    %20 = vector.broadcast %cst : f32 to vector<64x6xf32>
    %21 = arith.maximumf %19, %20 : vector<64x6xf32>
    %c63_i32_6 = arith.constant 63 : i32
    %22 = tpu.dynamic_rotate %21 by %c63_i32_6 dim 0 : vector<64x6xf32>, i32 -> vector<64x6xf32>
    %23 = arith.maximumf %21, %22 : vector<64x6xf32>
    %24 = tpu.iota {dimensions = array<i32: 0>} : vector<64x6xi32>
    %c32_i32 = arith.constant 32 : i32
    %c0_i32 = arith.constant 0 : i32
    %25 = arith.cmpi eq, %c32_i32, %c0_i32 : i32
    %c1_i32_7 = arith.constant 1 : i32
    %26 = arith.select %25, %c1_i32_7, %c32_i32 : i32
    %27 = vector.broadcast %26 : i32 to vector<64x6xi32>
    %28 = arith.remsi %24, %27 : vector<64x6xi32>
    %c0_i32_8 = arith.constant 0 : i32
    %29 = vector.broadcast %c0_i32_8 : i32 to vector<64x6xi32>
    %30 = arith.cmpi ne, %28, %29 : vector<64x6xi32>
    %c0_i32_9 = arith.constant 0 : i32
    %31 = vector.broadcast %c0_i32_9 : i32 to vector<64x6xi32>
    %32 = arith.cmpi slt, %28, %31 : vector<64x6xi32>
    %c0_i32_10 = arith.constant 0 : i32
    %33 = arith.cmpi slt, %26, %c0_i32_10 : i32
    %34 = vector.broadcast %33 : i1 to vector<64x6xi1>
    %35 = vector.broadcast %34 : vector<64x6xi1> to vector<64x6xi1>
    %36 = arith.xori %32, %35 : vector<64x6xi1>
    %37 = arith.andi %36, %30 : vector<64x6xi1>
    %38 = vector.broadcast %26 : i32 to vector<64x6xi32>
    %39 = arith.addi %28, %38 : vector<64x6xi32>
    %40 = arith.select %37, %39, %28 : vector<64x6xi1>, vector<64x6xi32>
    %c17_i32 = arith.constant 17 : i32
    %41 = vector.broadcast %c17_i32 : i32 to vector<64x6xi32>
    %42 = arith.cmpi slt, %40, %41 : vector<64x6xi32>
    %cst_11 = arith.constant 0.000000e+00 : f32
    %43 = vector.broadcast %cst_11 : f32 to vector<64x6xf32>
    %44 = arith.select %42, %23, %43 : vector<64x6xi1>, vector<64x6xf32>
    %c1_i32_12 = arith.constant 1 : i32
    %45 = tpu.dynamic_rotate %44 by %c1_i32_12 dim 0 : vector<64x6xf32>, i32 -> vector<64x6xf32>
    %c16 = arith.constant 16 : index
    %c0_13 = arith.constant 0 : index
    %46 = vector.load %arg2[%c16, %c0_13] : memref<384x128xf32, #tpu.memory_space<vmem>>, vector<6x12xf32>
    %cst_14 = arith.constant dense<0.000000e+00> : vector<64x12xf32>
    %47 = tpu.matmul %45, %46, %cst_14 {dimension_numbers = #tpu.dot_dimension_numbers<[1], [0], [0], [1], [0, 0, 1, 1], [], []>} : vector<64x6xf32>, vector<6x12xf32>, vector<64x12xf32> -> vector<64x12xf32>
    %c24 = arith.constant 24 : index
    %c0_15 = arith.constant 0 : index
    %48 = vector.load %arg2[%c24, %c0_15] : memref<384x128xf32, #tpu.memory_space<vmem>>, vector<6x12xf32>
    %cst_16 = arith.constant dense<0.000000e+00> : vector<64x12xf32>
    %49 = tpu.matmul %44, %48, %cst_16 {dimension_numbers = #tpu.dot_dimension_numbers<[1], [0], [0], [1], [0, 0, 1, 1], [], []>} : vector<64x6xf32>, vector<6x12xf32>, vector<64x12xf32> -> vector<64x12xf32>
    %50 = arith.addf %47, %49 : vector<64x12xf32>
    %c63_i32_17 = arith.constant 63 : i32
    %51 = tpu.dynamic_rotate %44 by %c63_i32_17 dim 0 : vector<64x6xf32>, i32 -> vector<64x6xf32>
    %c32 = arith.constant 32 : index
    %c0_18 = arith.constant 0 : index
    %52 = vector.load %arg2[%c32, %c0_18] : memref<384x128xf32, #tpu.memory_space<vmem>>, vector<6x12xf32>
    %cst_19 = arith.constant dense<0.000000e+00> : vector<64x12xf32>
    %53 = tpu.matmul %51, %52, %cst_19 {dimension_numbers = #tpu.dot_dimension_numbers<[1], [0], [0], [1], [0, 0, 1, 1], [], []>} : vector<64x6xf32>, vector<6x12xf32>, vector<64x12xf32> -> vector<64x12xf32>
    %54 = arith.addf %50, %53 : vector<64x12xf32>
    %c40 = arith.constant 40 : index
    %c0_20 = arith.constant 0 : index
    %55 = vector.load %arg2[%c40, %c0_20] : memref<384x128xf32, #tpu.memory_space<vmem>>, vector<1x12xf32>
    %56 = vector.broadcast %55 : vector<1x12xf32> to vector<64x12xf32>
    %57 = arith.addf %54, %56 : vector<64x12xf32>
    %cst_21 = arith.constant 0.000000e+00 : f32
    %58 = vector.broadcast %cst_21 : f32 to vector<64x12xf32>
    %59 = arith.maximumf %57, %58 : vector<64x12xf32>
    %c63_i32_22 = arith.constant 63 : i32
    %60 = tpu.dynamic_rotate %59 by %c63_i32_22 dim 0 : vector<64x12xf32>, i32 -> vector<64x12xf32>
    %61 = arith.maximumf %59, %60 : vector<64x12xf32>
    %c62_i32 = arith.constant 62 : i32
    %62 = tpu.dynamic_rotate %59 by %c62_i32 dim 0 : vector<64x12xf32>, i32 -> vector<64x12xf32>
    %63 = arith.maximumf %61, %62 : vector<64x12xf32>
    %c0_23 = arith.constant 0 : index
    %c0_24 = arith.constant 0 : index
    %64 = vector.load %arg4[%c0_23, %c0_24] : memref<64x12xf32, #tpu.memory_space<vmem>>, vector<64x12xf32>
    tpu.vector_store %arg4[%c0_23, %c0_24], %63 {strides = array<i32>} : memref<64x12xf32, #tpu.memory_space<vmem>>, vector<64x12xf32>,
    %c0_25 = arith.constant 0 : index
    %c0_26 = arith.constant 0 : index
    %65 = tpu.strided_load %arg4[%c0_25, %c0_26] {strides = array<i32: 2, 1>} : memref<64x12xf32, #tpu.memory_space<vmem>>, vector<32x12xf32>
    %66 = tpu.iota {dimensions = array<i32: 0>} : vector<32x12xi32>
    %c16_i32 = arith.constant 16 : i32
    %c0_i32_27 = arith.constant 0 : i32
    %67 = arith.cmpi eq, %c16_i32, %c0_i32_27 : i32
    %c1_i32_28 = arith.constant 1 : i32
    %68 = arith.select %67, %c1_i32_28, %c16_i32 : i32
    %69 = vector.broadcast %68 : i32 to vector<32x12xi32>
    %70 = arith.remsi %66, %69 : vector<32x12xi32>
    %c0_i32_29 = arith.constant 0 : i32
    %71 = vector.broadcast %c0_i32_29 : i32 to vector<32x12xi32>
    %72 = arith.cmpi ne, %70, %71 : vector<32x12xi32>
    %c0_i32_30 = arith.constant 0 : i32
    %73 = vector.broadcast %c0_i32_30 : i32 to vector<32x12xi32>
    %74 = arith.cmpi slt, %70, %73 : vector<32x12xi32>
    %c0_i32_31 = arith.constant 0 : i32
    %75 = arith.cmpi slt, %68, %c0_i32_31 : i32
    %76 = vector.broadcast %75 : i1 to vector<32x12xi1>
    %77 = vector.broadcast %76 : vector<32x12xi1> to vector<32x12xi1>
    %78 = arith.xori %74, %77 : vector<32x12xi1>
    %79 = arith.andi %78, %72 : vector<32x12xi1>
    %80 = vector.broadcast %68 : i32 to vector<32x12xi32>
    %81 = arith.addi %70, %80 : vector<32x12xi32>
    %82 = arith.select %79, %81, %70 : vector<32x12xi1>, vector<32x12xi32>
    %c8_i32 = arith.constant 8 : i32
    %83 = vector.broadcast %c8_i32 : i32 to vector<32x12xi32>
    %84 = arith.cmpi slt, %82, %83 : vector<32x12xi32>
    %cst_32 = arith.constant 0.000000e+00 : f32
    %85 = vector.broadcast %cst_32 : f32 to vector<32x12xf32>
    %86 = arith.select %84, %65, %85 : vector<32x12xi1>, vector<32x12xf32>
    %c1_i32_33 = arith.constant 1 : i32
    %87 = tpu.dynamic_rotate %86 by %c1_i32_33 dim 0 : vector<32x12xf32>, i32 -> vector<32x12xf32>
    %c48 = arith.constant 48 : index
    %c0_34 = arith.constant 0 : index
    %88 = vector.load %arg2[%c48, %c0_34] : memref<384x128xf32, #tpu.memory_space<vmem>>, vector<12x20xf32>
    %cst_35 = arith.constant dense<0.000000e+00> : vector<32x20xf32>
    %89 = tpu.matmul %87, %88, %cst_35 {dimension_numbers = #tpu.dot_dimension_numbers<[1], [0], [0], [1], [0, 0, 1, 1], [], []>} : vector<32x12xf32>, vector<12x20xf32>, vector<32x20xf32> -> vector<32x20xf32>
    %c64 = arith.constant 64 : index
    %c0_36 = arith.constant 0 : index
    %90 = vector.load %arg2[%c64, %c0_36] : memref<384x128xf32, #tpu.memory_space<vmem>>, vector<12x20xf32>
    %cst_37 = arith.constant dense<0.000000e+00> : vector<32x20xf32>
    %91 = tpu.matmul %86, %90, %cst_37 {dimension_numbers = #tpu.dot_dimension_numbers<[1], [0], [0], [1], [0, 0, 1, 1], [], []>} : vector<32x12xf32>, vector<12x20xf32>, vector<32x20xf32> -> vector<32x20xf32>
    %92 = arith.addf %89, %91 : vector<32x20xf32>
    %c31_i32 = arith.constant 31 : i32
    %93 = tpu.dynamic_rotate %86 by %c31_i32 dim 0 : vector<32x12xf32>, i32 -> vector<32x12xf32>
    %c80 = arith.constant 80 : index
    %c0_38 = arith.constant 0 : index
    %94 = vector.load %arg2[%c80, %c0_38] : memref<384x128xf32, #tpu.memory_space<vmem>>, vector<12x20xf32>
    %cst_39 = arith.constant dense<0.000000e+00> : vector<32x20xf32>
    %95 = tpu.matmul %93, %94, %cst_39 {dimension_numbers = #tpu.dot_dimension_numbers<[1], [0], [0], [1], [0, 0, 1, 1], [], []>} : vector<32x12xf32>, vector<12x20xf32>, vector<32x20xf32> -> vector<32x20xf32>
    %96 = arith.addf %92, %95 : vector<32x20xf32>
    %c96 = arith.constant 96 : index
    %c0_40 = arith.constant 0 : index
    %97 = vector.load %arg2[%c96, %c0_40] : memref<384x128xf32, #tpu.memory_space<vmem>>, vector<1x20xf32>
    %98 = vector.broadcast %97 : vector<1x20xf32> to vector<32x20xf32>
    %99 = arith.addf %96, %98 : vector<32x20xf32>
    %cst_41 = arith.constant 0.000000e+00 : f32
    %100 = vector.broadcast %cst_41 : f32 to vector<32x20xf32>
    %101 = arith.maximumf %99, %100 : vector<32x20xf32>
    %c0_42 = arith.constant 0 : index
    %c0_43 = arith.constant 0 : index
    %102 = vector.load %arg5[%c0_42, %c0_43] : memref<32x20xf32, #tpu.memory_space<vmem>>, vector<32x20xf32>
    tpu.vector_store %arg5[%c0_42, %c0_43], %101 {strides = array<i32>} : memref<32x20xf32, #tpu.memory_space<vmem>>, vector<32x20xf32>,
    %cst_44 = arith.constant 0.000000e+00 : f32
    %103 = vector.broadcast %cst_44 : f32 to vector<2x60xf32>
    %c0_45 = arith.constant 0 : index
    %c0_46 = arith.constant 0 : index
    %104 = tpu.strided_load %arg5[%c0_45, %c0_46] {strides = array<i32: 16, 1>} : memref<32x20xf32, #tpu.memory_space<vmem>>, vector<2x20xf32>
    %c1_47 = arith.constant 1 : index
    %c0_48 = arith.constant 0 : index
    %105 = tpu.strided_load %arg5[%c1_47, %c0_48] {strides = array<i32: 16, 1>} : memref<32x20xf32, #tpu.memory_space<vmem>>, vector<2x20xf32>
    %106 = arith.maximumf %104, %105 : vector<2x20xf32>
    %c104 = arith.constant 104 : index
    %c0_49 = arith.constant 0 : index
    %107 = vector.load %arg2[%c104, %c0_49] : memref<384x128xf32, #tpu.memory_space<vmem>>, vector<20x60xf32>
    %cst_50 = arith.constant dense<0.000000e+00> : vector<2x60xf32>
    %108 = tpu.matmul %106, %107, %cst_50 {dimension_numbers = #tpu.dot_dimension_numbers<[1], [0], [0], [1], [0, 0, 1, 1], [], []>} : vector<2x20xf32>, vector<20x60xf32>, vector<2x60xf32> -> vector<2x60xf32>
    %109 = arith.addf %103, %108 : vector<2x60xf32>
    %c2_51 = arith.constant 2 : index
    %c0_52 = arith.constant 0 : index
    %110 = tpu.strided_load %arg5[%c2_51, %c0_52] {strides = array<i32: 16, 1>} : memref<32x20xf32, #tpu.memory_space<vmem>>, vector<2x20xf32>
    %c3 = arith.constant 3 : index
    %c0_53 = arith.constant 0 : index
    %111 = tpu.strided_load %arg5[%c3, %c0_53] {strides = array<i32: 16, 1>} : memref<32x20xf32, #tpu.memory_space<vmem>>, vector<2x20xf32>
    %112 = arith.maximumf %110, %111 : vector<2x20xf32>
    %c128 = arith.constant 128 : index
    %c0_54 = arith.constant 0 : index
    %113 = vector.load %arg2[%c128, %c0_54] : memref<384x128xf32, #tpu.memory_space<vmem>>, vector<20x60xf32>
    %cst_55 = arith.constant dense<0.000000e+00> : vector<2x60xf32>
    %114 = tpu.matmul %112, %113, %cst_55 {dimension_numbers = #tpu.dot_dimension_numbers<[1], [0], [0], [1], [0, 0, 1, 1], [], []>} : vector<2x20xf32>, vector<20x60xf32>, vector<2x60xf32> -> vector<2x60xf32>
    %115 = arith.addf %109, %114 : vector<2x60xf32>
    %c4 = arith.constant 4 : index
    %c0_56 = arith.constant 0 : index
    %116 = tpu.strided_load %arg5[%c4, %c0_56] {strides = array<i32: 16, 1>} : memref<32x20xf32, #tpu.memory_space<vmem>>, vector<2x20xf32>
    %c5 = arith.constant 5 : index
    %c0_57 = arith.constant 0 : index
    %117 = tpu.strided_load %arg5[%c5, %c0_57] {strides = array<i32: 16, 1>} : memref<32x20xf32, #tpu.memory_space<vmem>>, vector<2x20xf32>
    %118 = arith.maximumf %116, %117 : vector<2x20xf32>
    %c152 = arith.constant 152 : index
    %c0_58 = arith.constant 0 : index
    %119 = vector.load %arg2[%c152, %c0_58] : memref<384x128xf32, #tpu.memory_space<vmem>>, vector<20x60xf32>
    %cst_59 = arith.constant dense<0.000000e+00> : vector<2x60xf32>
    %120 = tpu.matmul %118, %119, %cst_59 {dimension_numbers = #tpu.dot_dimension_numbers<[1], [0], [0], [1], [0, 0, 1, 1], [], []>} : vector<2x20xf32>, vector<20x60xf32>, vector<2x60xf32> -> vector<2x60xf32>
    %121 = arith.addf %115, %120 : vector<2x60xf32>
    %c6 = arith.constant 6 : index
    %c0_60 = arith.constant 0 : index
    %122 = tpu.strided_load %arg5[%c6, %c0_60] {strides = array<i32: 16, 1>} : memref<32x20xf32, #tpu.memory_space<vmem>>, vector<2x20xf32>
    %c7 = arith.constant 7 : index
    %c0_61 = arith.constant 0 : index
    %123 = tpu.strided_load %arg5[%c7, %c0_61] {strides = array<i32: 16, 1>} : memref<32x20xf32, #tpu.memory_space<vmem>>, vector<2x20xf32>
    %124 = arith.maximumf %122, %123 : vector<2x20xf32>
    %c176 = arith.constant 176 : index
    %c0_62 = arith.constant 0 : index
    %125 = vector.load %arg2[%c176, %c0_62] : memref<384x128xf32, #tpu.memory_space<vmem>>, vector<20x60xf32>
    %cst_63 = arith.constant dense<0.000000e+00> : vector<2x60xf32>
    %126 = tpu.matmul %124, %125, %cst_63 {dimension_numbers = #tpu.dot_dimension_numbers<[1], [0], [0], [1], [0, 0, 1, 1], [], []>} : vector<2x20xf32>, vector<20x60xf32>, vector<2x60xf32> -> vector<2x60xf32>
    %127 = arith.addf %121, %126 : vector<2x60xf32>
    %c200 = arith.constant 200 : index
    %c0_64 = arith.constant 0 : index
    %128 = vector.load %arg2[%c200, %c0_64] : memref<384x128xf32, #tpu.memory_space<vmem>>, vector<1x60xf32>
    %129 = vector.broadcast %128 : vector<1x60xf32> to vector<2x60xf32>
    %130 = arith.addf %127, %129 : vector<2x60xf32>
    %cst_65 = arith.constant 0.000000e+00 : f32
    %131 = vector.broadcast %cst_65 : f32 to vector<2x60xf32>
    %132 = arith.maximumf %130, %131 : vector<2x60xf32>
    %c208 = arith.constant 208 : index
    %c0_66 = arith.constant 0 : index
    %133 = vector.load %arg2[%c208, %c0_66] : memref<384x128xf32, #tpu.memory_space<vmem>>, vector<60x50xf32>
    %cst_67 = arith.constant dense<0.000000e+00> : vector<2x50xf32>
    %134 = tpu.matmul %132, %133, %cst_67 {dimension_numbers = #tpu.dot_dimension_numbers<[1], [0], [0], [1], [0, 0, 1, 1], [], []>} : vector<2x60xf32>, vector<60x50xf32>, vector<2x50xf32> -> vector<2x50xf32>
    %c272 = arith.constant 272 : index
    %c0_68 = arith.constant 0 : index
    %135 = vector.load %arg2[%c272, %c0_68] : memref<384x128xf32, #tpu.memory_space<vmem>>, vector<1x50xf32>
    %136 = vector.broadcast %135 : vector<1x50xf32> to vector<2x50xf32>
    %137 = arith.addf %134, %136 : vector<2x50xf32>
    %cst_69 = arith.constant 0.000000e+00 : f32
    %138 = vector.broadcast %cst_69 : f32 to vector<2x50xf32>
    %139 = arith.maximumf %137, %138 : vector<2x50xf32>
    %c280 = arith.constant 280 : index
    %c0_70 = arith.constant 0 : index
    %140 = vector.load %arg2[%c280, %c0_70] : memref<384x128xf32, #tpu.memory_space<vmem>>, vector<50x25xf32>
    %cst_71 = arith.constant dense<0.000000e+00> : vector<2x25xf32>
    %141 = tpu.matmul %139, %140, %cst_71 {dimension_numbers = #tpu.dot_dimension_numbers<[1], [0], [0], [1], [0, 0, 1, 1], [], []>} : vector<2x50xf32>, vector<50x25xf32>, vector<2x25xf32> -> vector<2x25xf32>
    %c336 = arith.constant 336 : index
    %c0_72 = arith.constant 0 : index
    %142 = vector.load %arg2[%c336, %c0_72] : memref<384x128xf32, #tpu.memory_space<vmem>>, vector<1x25xf32>
    %143 = vector.broadcast %142 : vector<1x25xf32> to vector<2x25xf32>
    %144 = arith.addf %141, %143 : vector<2x25xf32>
    %cst_73 = arith.constant 0.000000e+00 : f32
    %145 = vector.broadcast %cst_73 : f32 to vector<2x25xf32>
    %146 = arith.maximumf %144, %145 : vector<2x25xf32>
    %c344 = arith.constant 344 : index
    %c0_74 = arith.constant 0 : index
    %147 = vector.load %arg2[%c344, %c0_74] : memref<384x128xf32, #tpu.memory_space<vmem>>, vector<25x3xf32>
    %cst_75 = arith.constant dense<0.000000e+00> : vector<2x3xf32>
    %148 = tpu.matmul %146, %147, %cst_75 {dimension_numbers = #tpu.dot_dimension_numbers<[1], [0], [0], [1], [0, 0, 1, 1], [], []>} : vector<2x25xf32>, vector<25x3xf32>, vector<2x3xf32> -> vector<2x3xf32>
    %c376 = arith.constant 376 : index
    %c0_76 = arith.constant 0 : index
    %149 = vector.load %arg2[%c376, %c0_76] : memref<384x128xf32, #tpu.memory_space<vmem>>, vector<1x3xf32>
    %150 = vector.broadcast %149 : vector<1x3xf32> to vector<2x3xf32>
    %151 = arith.addf %148, %150 : vector<2x3xf32>
    %c0_77 = arith.constant 0 : index
    %c0_78 = arith.constant 0 : index
    %152 = vector.load %arg3[%c0_77, %c0_78] : memref<2x3xf32, #tpu.memory_space<vmem>>, vector<2x3xf32>
    tpu.vector_store %arg3[%c0_77, %c0_78], %151 {strides = array<i32>} : memref<2x3xf32, #tpu.memory_space<vmem>>, vector<2x3xf32>,
    return
  }
  func.func @transform_0(%arg0: i32) -> (i32, i32) {
    %c0_i32 = arith.constant 0 : i32
    %c0_i32_0 = arith.constant 0 : i32
    return %arg0, %c0_i32 : i32, i32
  }
  func.func @transform_1(%arg0: i32) -> (i32, i32) {
    %c0_i32 = arith.constant 0 : i32
    %c0_i32_0 = arith.constant 0 : i32
    %c0_i32_1 = arith.constant 0 : i32
    return %c0_i32, %c0_i32_0 : i32, i32
  }
  func.func @transform_2(%arg0: i32) -> (i32, i32) {
    %c0_i32 = arith.constant 0 : i32
    %c0_i32_0 = arith.constant 0 : i32
    return %arg0, %c0_i32 : i32, i32
  }
}

</mosaic_0001>

<llo_original>
// kernel: cnn_forward_pallas.1
$region0: #{cnn_forward_pallas.1}
  #allocation0 [shape = 'u32[]', space=smem, size = 0x4, offset = 0x4, fixed_abs, tag = 'smem constant byte address 0x4 - core index']
  #allocation1 [shape = 'u32[72,128]{1,0:T(1,128)}', space=vmem, size = 0x9000, scoped, tag = 'internal scratch']
  #allocation2 [shape = 'f32[64,12]{1,0:T(8,128)}', space=vmem, size = 0x8000, scoped, tag = 'scratch operand']
  #allocation3 [shape = 'f32[32,20]{1,0:T(8,128)}', space=vmem, size = 0x4000, scoped, tag = 'scratch operand']
  %s0 = inlined_call_operand.vmem [shape: f32[64,1], index: 0, kind: input, shape index: {}]
  %s1 = inlined_call_operand.vmem [shape: f32[384,128], index: 1, kind: input, shape index: {}]
  %s2 = inlined_call_operand.hbm [shape: f32[2,3], index: 2, kind: output, shape index: {}]
  %s3 = sld [smem:[#allocation0]]
  $region18: #{cnn_forward_pallas.1} parent=0
    _
  %s5 = ssub.s32 1, %s3
  %s6 = scalar_select 0, %s5, %s3
  $region1: #{cnn_forward_pallas.1} parent=0
    #allocation4 [shape = 'u8[1024]{0}', space=vmem, size = 0x400, scoped, tag = 'output window, operand 0, single buffered']
    #allocation5 [shape = 's32[1]{0}', space=sflag, size = 0x4, scoped, tag = 'scoped memory for cnn_forward_pallas.1']
    %7 = vsyncpa [#allocation5], 0
    // Predicated region
    $region2: #{cnn_forward_pallas.1} parent=1 // pred_check
      _
    $region3: #{cnn_forward_pallas.1} parent=1 // pred_check_branch
      %9 = sbr.rel (0) target = $region5
    $region4: #{cnn_forward_pallas.1} parent=1 // pred_region
      _
    $region5: #{cnn_forward_pallas.1} parent=1 // pred_fallthru
      _
    // Predicated region
    $region6: #{cnn_forward_pallas.1} parent=1 // pred_check
      _
    $region7: #{cnn_forward_pallas.1} parent=1 // pred_check_branch
      %11 = sbr.rel (0) target = $region9
    $region8: #{cnn_forward_pallas.1} parent=1 // pred_region
      _
    $region9: #{cnn_forward_pallas.1} parent=1 // pred_fallthru
      _
    %v12 = vld [vmem:[%s0] sm:$0xff]
    %v13 = vld [vmem:[%s0 + $0x8] sm:$0xff]
    %v14 = vld [vmem:[%s0 + $0x10] sm:$0xff]
    %v15 = vld [vmem:[%s0 + $0x18] sm:$0xff]
    %v16 = vld [vmem:[%s0 + $0x20] sm:$0xff]
    %v17 = vld [vmem:[%s0 + $0x28] sm:$0xff]
    %v18 = vld [vmem:[%s0 + $0x30] sm:$0xff]
    %v19 = vld [vmem:[%s0 + $0x38] sm:$0xff]
    %v20 = vld [vmem:[%s1] sm:$0x1]
    %v21 = vld [vmem:[%s1 + $0x1] sm:$0x1]
    %v22 = vld [vmem:[%s1 + $0x2] sm:$0x1]
    %v23 = vrot.slane %v12, 7
    %v24 = vrot.slane %v13, 7
    %v25 = vrot.slane %v14, 7
    %v26 = vrot.slane %v15, 7
    %v27 = vrot.slane %v16, 7
    %v28 = vrot.slane %v17, 7
    %v29 = vrot.slane %v18, 7
    %v30 = vrot.slane %v19, 7
    %v31 = vlaneseq
    %v32 = vshrl.u32 %v31, 7
    %vm33 = vcmp.lt.s32.totalorder %v32, 1
    %v34 = vsel %vm33, %v29, %v30
    %v35 = vsel %vm33, %v28, %v29
    %v36 = vsel %vm33, %v27, %v28
    %v37 = vsel %vm33, %v26, %v27
    %v38 = vsel %vm33, %v25, %v26
    %v39 = vsel %vm33, %v24, %v25
    %v40 = vsel %vm33, %v23, %v24
    %v41 = vsel %vm33, %v30, %v23
    %43 = vset.pattern.permute.xlu0 0
    %44 = vperm.xlu0 %43, %v41
    %v45 = vpop.permute.xlu0 %44
    %48 = vset.pattern.permute.xlu0 0
    %49 = vperm.xlu0 %48, %v40
    %v50 = vpop.permute.xlu0 %49
    %53 = vset.pattern.permute.xlu0 0
    %54 = vperm.xlu0 %53, %v39
    %v55 = vpop.permute.xlu0 %54
    %58 = vset.pattern.permute.xlu0 0
    %59 = vperm.xlu0 %58, %v38
    %v60 = vpop.permute.xlu0 %59
    %63 = vset.pattern.permute.xlu0 0
    %64 = vperm.xlu0 %63, %v37
    %v65 = vpop.permute.xlu0 %64
    %68 = vset.pattern.permute.xlu0 0
    %69 = vperm.xlu0 %68, %v36
    %v70 = vpop.permute.xlu0 %69
    %73 = vset.pattern.permute.xlu0 0
    %74 = vperm.xlu0 %73, %v35
    %v75 = vpop.permute.xlu0 %74
    %78 = vset.pattern.permute.xlu0 0
    %79 = vperm.xlu0 %78, %v34
    %v80 = vpop.permute.xlu0 %79
    %v82 = vperm.slane %v20, 0
    %v83 = vmul.f32 %v45, %v82
    %v84 = vmul.f32 %v50, %v82
    %v85 = vmul.f32 %v55, %v82
    %v86 = vmul.f32 %v60, %v82
    %v87 = vmul.f32 %v65, %v82
    %v88 = vmul.f32 %v70, %v82
    %v89 = vmul.f32 %v75, %v82
    %v90 = vmul.f32 %v80, %v82
    %92 = vset.pattern.permute.xlu0 0
    %93 = vperm.xlu0 %92, %v12
    %v94 = vpop.permute.xlu0 %93
    %97 = vset.pattern.permute.xlu0 0
    %98 = vperm.xlu0 %97, %v13
    %v99 = vpop.permute.xlu0 %98
    %102 = vset.pattern.permute.xlu0 0
    %103 = vperm.xlu0 %102, %v14
    %v104 = vpop.permute.xlu0 %103
    %107 = vset.pattern.permute.xlu0 0
    %108 = vperm.xlu0 %107, %v15
    %v109 = vpop.permute.xlu0 %108
    %112 = vset.pattern.permute.xlu0 0
    %113 = vperm.xlu0 %112, %v16
    %v114 = vpop.permute.xlu0 %113
    %117 = vset.pattern.permute.xlu0 0
    %118 = vperm.xlu0 %117, %v17
    %v119 = vpop.permute.xlu0 %118
    %122 = vset.pattern.permute.xlu0 0
    %123 = vperm.xlu0 %122, %v18
    %v124 = vpop.permute.xlu0 %123
    %127 = vset.pattern.permute.xlu0 0
    %128 = vperm.xlu0 %127, %v19
    %v129 = vpop.permute.xlu0 %128
    %v131 = vperm.slane %v21, 0
    %v132 = vmul.f32 %v94, %v131
    %v133 = vmul.f32 %v99, %v131
    %v134 = vmul.f32 %v104, %v131
    %v135 = vmul.f32 %v109, %v131
    %v136 = vmul.f32 %v114, %v131
    %v137 = vmul.f32 %v119, %v131
    %v138 = vmul.f32 %v124, %v131
    %v139 = vmul.f32 %v129, %v131
    %v140 = vadd.f32 %v83, %v132
    %v141 = vadd.f32 %v84, %v133
    %v142 = vadd.f32 %v85, %v134
    %v143 = vadd.f32 %v86, %v135
    %v144 = vadd.f32 %v87, %v136
    %v145 = vadd.f32 %v88, %v137
    %v146 = vadd.f32 %v89, %v138
    %v147 = vadd.f32 %v90, %v139
    %v148 = vrot.slane %v12, 1
    %v149 = vrot.slane %v13, 1
    %v150 = vrot.slane %v14, 1
    %v151 = vrot.slane %v15, 1
    %v152 = vrot.slane %v16, 1
    %v153 = vrot.slane %v17, 1
    %v154 = vrot.slane %v18, 1
    %v155 = vrot.slane %v19, 1
    %vm156 = vcmp.lt.s32.totalorder %v32, 7
    %v157 = vsel %vm156, %v154, %v155
    %v158 = vsel %vm156, %v153, %v154
    %v159 = vsel %vm156, %v152, %v153
    %v160 = vsel %vm156, %v151, %v152
    %v161 = vsel %vm156, %v150, %v151
    %v162 = vsel %vm156, %v149, %v150
    %v163 = vsel %vm156, %v148, %v149
    %v164 = vsel %vm156, %v155, %v148
    %166 = vset.pattern.permute.xlu0 0
    %167 = vperm.xlu0 %166, %v163
    %v168 = vpop.permute.xlu0 %167
    %171 = vset.pattern.permute.xlu0 0
    %172 = vperm.xlu0 %171, %v162
    %v173 = vpop.permute.xlu0 %172
    %176 = vset.pattern.permute.xlu0 0
    %177 = vperm.xlu0 %176, %v161
    %v178 = vpop.permute.xlu0 %177
    %181 = vset.pattern.permute.xlu0 0
    %182 = vperm.xlu0 %181, %v160
    %v183 = vpop.permute.xlu0 %182
    %186 = vset.pattern.permute.xlu0 0
    %187 = vperm.xlu0 %186, %v159
    %v188 = vpop.permute.xlu0 %187
    %191 = vset.pattern.permute.xlu0 0
    %192 = vperm.xlu0 %191, %v158
    %v193 = vpop.permute.xlu0 %192
    %196 = vset.pattern.permute.xlu0 0
    %197 = vperm.xlu0 %196, %v157
    %v198 = vpop.permute.xlu0 %197
    %201 = vset.pattern.permute.xlu0 0
    %202 = vperm.xlu0 %201, %v164
    %v203 = vpop.permute.xlu0 %202
    %v205 = vperm.slane %v22, 0
    %v206 = vmul.f32 %v168, %v205
    %v207 = vmul.f32 %v173, %v205
    %v208 = vmul.f32 %v178, %v205
    %v209 = vmul.f32 %v183, %v205
    %v210 = vmul.f32 %v188, %v205
    %v211 = vmul.f32 %v193, %v205
    %v212 = vmul.f32 %v198, %v205
    %v213 = vmul.f32 %v203, %v205
    %v214 = vadd.f32 %v140, %v206
    %v215 = vadd.f32 %v141, %v207
    %v216 = vadd.f32 %v142, %v208
    %v217 = vadd.f32 %v143, %v209
    %v218 = vadd.f32 %v144, %v210
    %v219 = vadd.f32 %v145, %v211
    %v220 = vadd.f32 %v146, %v212
    %v221 = vadd.f32 %v147, %v213
    %v222 = vld [vmem:[%s1 + $0x8] sm:$0x1]
    %v223 = vperm.slane %v222, 0
    %v224 = vadd.f32 %v214, %v223
    %v225 = vadd.f32 %v215, %v223
    %v226 = vadd.f32 %v216, %v223
    %v227 = vadd.f32 %v217, %v223
    %v228 = vadd.f32 %v218, %v223
    %v229 = vadd.f32 %v219, %v223
    %v230 = vadd.f32 %v220, %v223
    %v231 = vadd.f32 %v221, %v223
    %v232 = vmax.f32 %v224, 0.0
    %v233 = vmax.f32 %v225, 0.0
    %v234 = vmax.f32 %v226, 0.0
    %v235 = vmax.f32 %v227, 0.0
    %v236 = vmax.f32 %v228, 0.0
    %v237 = vmax.f32 %v229, 0.0
    %v238 = vmax.f32 %v230, 0.0
    %v239 = vmax.f32 %v231, 0.0
    %v240 = vrot.slane %v232, 1
    %v241 = vrot.slane %v233, 1
    %v242 = vrot.slane %v234, 1
    %v243 = vrot.slane %v235, 1
    %v244 = vrot.slane %v236, 1
    %v245 = vrot.slane %v237, 1
    %v246 = vrot.slane %v238, 1
    %v247 = vrot.slane %v239, 1
    %v248 = vsel %vm156, %v246, %v247
    %v249 = vsel %vm156, %v245, %v246
    %v250 = vsel %vm156, %v244, %v245
    %v251 = vsel %vm156, %v243, %v244
    %v252 = vsel %vm156, %v242, %v243
    %v253 = vsel %vm156, %v241, %v242
    %v254 = vsel %vm156, %v240, %v241
    %v255 = vsel %vm156, %v247, %v240
    %v256 = vmax.f32 %v232, %v254
    %v257 = vmax.f32 %v233, %v253
    %v258 = vmax.f32 %v234, %v252
    %v259 = vmax.f32 %v235, %v251
    %v260 = vmax.f32 %v236, %v250
    %v261 = vmax.f32 %v237, %v249
    %v262 = vmax.f32 %v238, %v248
    %v263 = vmax.f32 %v239, %v255
    %v264 = vadd.s32 %v32, 8
    %v265 = vadd.s32 %v32, 16
    %v266 = vadd.s32 %v32, 24
    %v267 = vadd.s32 %v32, 32
    %v268 = vadd.s32 %v32, 40
    %v269 = vadd.s32 %v32, 48
    %v270 = vadd.s32 %v32, 56
    %vm271 = vcmp.lt.s32.totalorder %v32, 0
    %v272 = vsub.s32 0, %v32
    %v273 = vsel %vm271, %v272, %v32
    %v274 = vshrl.u32 %v273, 5
    %v275 = vand.u32 %v273, 31
    %v276 = vsub.s32 0, %v275
    %v277 = vsel %vm271, %v276, %v275
    %vm278 = vcmp.lt.s32.totalorder %v264, 0
    %v279 = vsub.s32 0, %v264
    %v280 = vsel %vm278, %v279, %v264
    %v281 = vshrl.u32 %v280, 5
    %v282 = vand.u32 %v280, 31
    %v283 = vsub.s32 0, %v282
    %v284 = vsel %vm278, %v283, %v282
    %vm285 = vcmp.lt.s32.totalorder %v265, 0
    %v286 = vsub.s32 0, %v265
    %v287 = vsel %vm285, %v286, %v265
    %v288 = vshrl.u32 %v287, 5
    %v289 = vand.u32 %v287, 31
    %v290 = vsub.s32 0, %v289
    %v291 = vsel %vm285, %v290, %v289
    %vm292 = vcmp.lt.s32.totalorder %v266, 0
    %v293 = vsub.s32 0, %v266
    %v294 = vsel %vm292, %v293, %v266
    %v295 = vshrl.u32 %v294, 5
    %v296 = vand.u32 %v294, 31
    %v297 = vsub.s32 0, %v296
    %v298 = vsel %vm292, %v297, %v296
    %vm299 = vcmp.lt.s32.totalorder %v267, 0
    %v300 = vsub.s32 0, %v267
    %v301 = vsel %vm299, %v300, %v267
    %v302 = vshrl.u32 %v301, 5
    %v303 = vand.u32 %v301, 31
    %v304 = vsub.s32 0, %v303
    %v305 = vsel %vm299, %v304, %v303
    %vm306 = vcmp.lt.s32.totalorder %v268, 0
    %v307 = vsub.s32 0, %v268
    %v308 = vsel %vm306, %v307, %v268
    %v309 = vshrl.u32 %v308, 5
    %v310 = vand.u32 %v308, 31
    %v311 = vsub.s32 0, %v310
    %v312 = vsel %vm306, %v311, %v310
    %vm313 = vcmp.lt.s32.totalorder %v269, 0
    %v314 = vsub.s32 0, %v269
    %v315 = vsel %vm313, %v314, %v269
    %v316 = vshrl.u32 %v315, 5
    %v317 = vand.u32 %v315, 31
    %v318 = vsub.s32 0, %v317
    %v319 = vsel %vm313, %v318, %v317
    %vm320 = vcmp.lt.s32.totalorder %v270, 0
    %v321 = vsub.s32 0, %v270
    %v322 = vsel %vm320, %v321, %v270
    %v323 = vshrl.u32 %v322, 5
    %v324 = vand.u32 %v322, 31
    %v325 = vsub.s32 0, %v324
    %v326 = vsel %vm320, %v325, %v324
    %vm327 = vcmp.ne.s32.totalorder %v277, 0
    %vm328 = vcmp.ne.s32.totalorder %v284, 0
    %vm329 = vcmp.ne.s32.totalorder %v291, 0
    %vm330 = vcmp.ne.s32.totalorder %v298, 0
    %vm331 = vcmp.ne.s32.totalorder %v305, 0
    %vm332 = vcmp.ne.s32.totalorder %v312, 0
    %vm333 = vcmp.ne.s32.totalorder %v319, 0
    %vm334 = vcmp.ne.s32.totalorder %v326, 0
    %vm335 = vcmp.lt.s32.totalorder %v277, 0
    %vm336 = vcmp.lt.s32.totalorder %v284, 0
    %vm337 = vcmp.lt.s32.totalorder %v291, 0
    %vm338 = vcmp.lt.s32.totalorder %v298, 0
    %vm339 = vcmp.lt.s32.totalorder %v305, 0
    %vm340 = vcmp.lt.s32.totalorder %v312, 0
    %vm341 = vcmp.lt.s32.totalorder %v319, 0
    %vm342 = vcmp.lt.s32.totalorder %v326, 0
    %vm343 = vmand %vm335, %vm327
    %vm344 = vmand %vm336, %vm328
    %vm345 = vmand %vm337, %vm329
    %vm346 = vmand %vm338, %vm330
    %vm347 = vmand %vm339, %vm331
    %vm348 = vmand %vm340, %vm332
    %vm349 = vmand %vm341, %vm333
    %vm350 = vmand %vm342, %vm334
    %v351 = vadd.s32 %v277, 32
    %v352 = vadd.s32 %v284, 32
    %v353 = vadd.s32 %v291, 32
    %v354 = vadd.s32 %v298, 32
    %v355 = vadd.s32 %v305, 32
    %v356 = vadd.s32 %v312, 32
    %v357 = vadd.s32 %v319, 32
    %v358 = vadd.s32 %v326, 32
    %v359 = vsel %vm343, %v351, %v277
    %v360 = vsel %vm344, %v352, %v284
    %v361 = vsel %vm345, %v353, %v291
    %v362 = vsel %vm346, %v354, %v298
    %v363 = vsel %vm347, %v355, %v305
    %v364 = vsel %vm348, %v356, %v312
    %v365 = vsel %vm349, %v357, %v319
    %v366 = vsel %vm350, %v358, %v326
    %vm367 = vcmp.lt.s32.totalorder %v359, 17
    %vm368 = vcmp.lt.s32.totalorder %v360, 17
    %vm369 = vcmp.lt.s32.totalorder %v361, 17
    %vm370 = vcmp.lt.s32.totalorder %v362, 17
    %vm371 = vcmp.lt.s32.totalorder %v363, 17
    %vm372 = vcmp.lt.s32.totalorder %v364, 17
    %vm373 = vcmp.lt.s32.totalorder %v365, 17
    %vm374 = vcmp.lt.s32.totalorder %v366, 17
    %v375 = vsel %vm367, %v256, 0.0
    %v376 = vsel %vm368, %v257, 0.0
    %v377 = vsel %vm369, %v258, 0.0
    %v378 = vsel %vm370, %v259, 0.0
    %v379 = vsel %vm371, %v260, 0.0
    %v380 = vsel %vm372, %v261, 0.0
    %v381 = vsel %vm373, %v262, 0.0
    %v382 = vsel %vm374, %v263, 0.0
    %v383 = vrot.slane %v375, 7
    %v384 = vrot.slane %v376, 7
    %v385 = vrot.slane %v377, 7
    %v386 = vrot.slane %v378, 7
    %v387 = vrot.slane %v379, 7
    %v388 = vrot.slane %v380, 7
    %v389 = vrot.slane %v381, 7
    %v390 = vrot.slane %v382, 7
    %v391 = vsel %vm33, %v389, %v390
    %v392 = vsel %vm33, %v388, %v389
    %v393 = vsel %vm33, %v387, %v388
    %v394 = vsel %vm33, %v386, %v387
    %v395 = vsel %vm33, %v385, %v386
    %v396 = vsel %vm33, %v384, %v385
    %v397 = vsel %vm33, %v383, %v384
    %v398 = vsel %vm33, %v390, %v383
    %v399 = vld [vmem:[%s1 + $0x10] sm:$0x3f]
    %v400 = vld [vmem:[%s1 + $0x18] sm:$0x3f]
    %vm401 = vcmask 48128
    %v403 = vsel %vm401, %v375, 0
    %v406 = vsel %vm401, %v376, 0
    %v409 = vsel %vm401, %v377, 0
    %v412 = vsel %vm401, %v378, 0
    %v415 = vsel %vm401, %v379, 0
    %v418 = vsel %vm401, %v380, 0
    %v421 = vsel %vm401, %v381, 0
    %v424 = vsel %vm401, %v382, 0
    %vm426 = vcmask 1045504
    %v428 = vsel %vm426, %v400, 0
    %430 = vmatpush.msra.mxu0 0.0
    %431 = vmatpush.msra.mxu0 0.0
    %432 = vmatpush.msra.mxu0 0.0
    %433 = vmatpush.msra.mxu0 0.0
    %434 = vmatpush.msra.mxu0 0.0
    %435 = vmatpush.msra.mxu0 0.0
    %436 = vmatpush.msra.mxu0 0.0
    %437 = vmatpush.msra.mxu0 0.0
    %438 = vmatpush.msra.mxu0 0.0
    %439 = vmatpush.msra.mxu0 0.0
    %440 = vmatpush.msra.mxu0 0.0
    %441 = vmatpush.msra.mxu0 0.0
    %442 = vmatpush.msra.mxu0 0.0
    %443 = vmatpush.msra.mxu0 0.0
    %444 = vmatpush.msra.mxu0 0.0
    %445 = vmatpush.msra.mxu0 %v428
    %446 = vmatmul.f32.gmra.mxu0 %v403
    %v447 = vpop.f32.mrf.mxu0
    %v448 = vadd.f32 0.0, %v447
    %449 = vmatmul.f32.gmra.mxu0 %v406
    %v450 = vpop.f32.mrf.mxu0
    %v451 = vadd.f32 0.0, %v450
    %452 = vmatmul.f32.gmra.mxu0 %v409
    %v453 = vpop.f32.mrf.mxu0
    %v454 = vadd.f32 0.0, %v453
    %455 = vmatmul.f32.gmra.mxu0 %v412
    %v456 = vpop.f32.mrf.mxu0
    %v457 = vadd.f32 0.0, %v456
    %458 = vmatmul.f32.gmra.mxu0 %v415
    %v459 = vpop.f32.mrf.mxu0
    %v460 = vadd.f32 0.0, %v459
    %461 = vmatmul.f32.gmra.mxu0 %v418
    %v462 = vpop.f32.mrf.mxu0
    %v463 = vadd.f32 0.0, %v462
    %464 = vmatmul.f32.gmra.mxu0 %v421
    %v465 = vpop.f32.mrf.mxu0
    %v466 = vadd.f32 0.0, %v465
    %467 = vmatmul.f32.gmra.mxu0 %v424
    %v468 = vpop.f32.mrf.mxu0
    %v469 = vadd.f32 0.0, %v468
    %470 = vdwg.mxu0
    %v472 = vsel %vm401, %v398, 0
    %v475 = vsel %vm401, %v397, 0
    %v478 = vsel %vm401, %v396, 0
    %v481 = vsel %vm401, %v395, 0
    %v484 = vsel %vm401, %v394, 0
    %v487 = vsel %vm401, %v393, 0
    %v490 = vsel %vm401, %v392, 0
    %v493 = vsel %vm401, %v391, 0
    %v496 = vsel %vm426, %v399, 0
    %498 = vmatpush.msra.mxu0 0.0
    %499 = vmatpush.msra.mxu0 0.0
    %500 = vmatpush.msra.mxu0 0.0
    %501 = vmatpush.msra.mxu0 0.0
    %502 = vmatpush.msra.mxu0 0.0
    %503 = vmatpush.msra.mxu0 0.0
    %504 = vmatpush.msra.mxu0 0.0
    %505 = vmatpush.msra.mxu0 0.0
    %506 = vmatpush.msra.mxu0 0.0
    %507 = vmatpush.msra.mxu0 0.0
    %508 = vmatpush.msra.mxu0 0.0
    %509 = vmatpush.msra.mxu0 0.0
    %510 = vmatpush.msra.mxu0 0.0
    %511 = vmatpush.msra.mxu0 0.0
    %512 = vmatpush.msra.mxu0 0.0
    %513 = vmatpush.msra.mxu0 %v496
    %514 = vmatmul.f32.gmra.mxu0 %v472
    %v515 = vpop.f32.mrf.mxu0
    %v516 = vadd.f32 %v448, %v515
    %517 = vmatmul.f32.gmra.mxu0 %v475
    %v518 = vpop.f32.mrf.mxu0
    %v519 = vadd.f32 %v451, %v518
    %520 = vmatmul.f32.gmra.mxu0 %v478
    %v521 = vpop.f32.mrf.mxu0
    %v522 = vadd.f32 %v454, %v521
    %523 = vmatmul.f32.gmra.mxu0 %v481
    %v524 = vpop.f32.mrf.mxu0
    %v525 = vadd.f32 %v457, %v524
    %526 = vmatmul.f32.gmra.mxu0 %v484
    %v527 = vpop.f32.mrf.mxu0
    %v528 = vadd.f32 %v460, %v527
    %529 = vmatmul.f32.gmra.mxu0 %v487
    %v530 = vpop.f32.mrf.mxu0
    %v531 = vadd.f32 %v463, %v530
    %532 = vmatmul.f32.gmra.mxu0 %v490
    %v533 = vpop.f32.mrf.mxu0
    %v534 = vadd.f32 %v466, %v533
    %535 = vmatmul.f32.gmra.mxu0 %v493
    %v536 = vpop.f32.mrf.mxu0
    %v537 = vadd.f32 %v469, %v536
    %538 = vdwg.mxu0
    %v539 = vrot.slane %v375, 1
    %v540 = vrot.slane %v376, 1
    %v541 = vrot.slane %v377, 1
    %v542 = vrot.slane %v378, 1
    %v543 = vrot.slane %v379, 1
    %v544 = vrot.slane %v380, 1
    %v545 = vrot.slane %v381, 1
    %v546 = vrot.slane %v382, 1
    %v547 = vsel %vm156, %v545, %v546
    %v548 = vsel %vm156, %v544, %v545
    %v549 = vsel %vm156, %v543, %v544
    %v550 = vsel %vm156, %v542, %v543
    %v551 = vsel %vm156, %v541, %v542
    %v552 = vsel %vm156, %v540, %v541
    %v553 = vsel %vm156, %v539, %v540
    %v554 = vsel %vm156, %v546, %v539
    %v555 = vld [vmem:[%s1 + $0x20] sm:$0x3f]
    %v557 = vsel %vm401, %v553, 0
    %v560 = vsel %vm401, %v552, 0
    %v563 = vsel %vm401, %v551, 0
    %v566 = vsel %vm401, %v550, 0
    %v569 = vsel %vm401, %v549, 0
    %v572 = vsel %vm401, %v548, 0
    %v575 = vsel %vm401, %v547, 0
    %v578 = vsel %vm401, %v554, 0
    %v581 = vsel %vm426, %v555, 0
    %583 = vmatpush.msra.mxu0 0.0
    %584 = vmatpush.msra.mxu0 0.0
    %585 = vmatpush.msra.mxu0 0.0
    %586 = vmatpush.msra.mxu0 0.0
    %587 = vmatpush.msra.mxu0 0.0
    %588 = vmatpush.msra.mxu0 0.0
    %589 = vmatpush.msra.mxu0 0.0
    %590 = vmatpush.msra.mxu0 0.0
    %591 = vmatpush.msra.mxu0 0.0
    %592 = vmatpush.msra.mxu0 0.0
    %593 = vmatpush.msra.mxu0 0.0
    %594 = vmatpush.msra.mxu0 0.0
    %595 = vmatpush.msra.mxu0 0.0
    %596 = vmatpush.msra.mxu0 0.0
    %597 = vmatpush.msra.mxu0 0.0
    %598 = vmatpush.msra.mxu0 %v581
    %599 = vmatmul.f32.gmra.mxu0 %v557
    %v600 = vpop.f32.mrf.mxu0
    %v601 = vadd.f32 0.0, %v600
    %602 = vmatmul.f32.gmra.mxu0 %v560
    %v603 = vpop.f32.mrf.mxu0
    %v604 = vadd.f32 0.0, %v603
    %605 = vmatmul.f32.gmra.mxu0 %v563
    %v606 = vpop.f32.mrf.mxu0
    %v607 = vadd.f32 0.0, %v606
    %608 = vmatmul.f32.gmra.mxu0 %v566
    %v609 = vpop.f32.mrf.mxu0
    %v610 = vadd.f32 0.0, %v609
    %611 = vmatmul.f32.gmra.mxu0 %v569
    %v612 = vpop.f32.mrf.mxu0
    %v613 = vadd.f32 0.0, %v612
    %614 = vmatmul.f32.gmra.mxu0 %v572
    %v615 = vpop.f32.mrf.mxu0
    %v616 = vadd.f32 0.0, %v615
    %617 = vmatmul.f32.gmra.mxu0 %v575
    %v618 = vpop.f32.mrf.mxu0
    %v619 = vadd.f32 0.0, %v618
    %620 = vmatmul.f32.gmra.mxu0 %v578
    %v621 = vpop.f32.mrf.mxu0
    %v622 = vadd.f32 0.0, %v621
    %623 = vdwg.mxu0
    %v624 = vadd.f32 %v516, %v601
    %v625 = vadd.f32 %v519, %v604
    %v626 = vadd.f32 %v522, %v607
    %v627 = vadd.f32 %v525, %v610
    %v628 = vadd.f32 %v528, %v613
    %v629 = vadd.f32 %v531, %v616
    %v630 = vadd.f32 %v534, %v619
    %v631 = vadd.f32 %v537, %v622
    %v632 = vld [vmem:[%s1 + $0x28] sm:$0x1]
    %v633 = vperm.slane %v632, 0
    %v634 = vadd.f32 %v624, %v633
    %v635 = vadd.f32 %v625, %v633
    %v636 = vadd.f32 %v626, %v633
    %v637 = vadd.f32 %v627, %v633
    %v638 = vadd.f32 %v628, %v633
    %v639 = vadd.f32 %v629, %v633
    %v640 = vadd.f32 %v630, %v633
    %v641 = vadd.f32 %v631, %v633
    %v642 = vmax.f32 %v634, 0.0
    %v643 = vmax.f32 %v635, 0.0
    %v644 = vmax.f32 %v636, 0.0
    %v645 = vmax.f32 %v637, 0.0
    %v646 = vmax.f32 %v638, 0.0
    %v647 = vmax.f32 %v639, 0.0
    %v648 = vmax.f32 %v640, 0.0
    %v649 = vmax.f32 %v641, 0.0
    %v650 = vrot.slane %v642, 1
    %v651 = vrot.slane %v643, 1
    %v652 = vrot.slane %v644, 1
    %v653 = vrot.slane %v645, 1
    %v654 = vrot.slane %v646, 1
    %v655 = vrot.slane %v647, 1
    %v656 = vrot.slane %v648, 1
    %v657 = vrot.slane %v649, 1
    %v658 = vsel %vm156, %v656, %v657
    %v659 = vsel %vm156, %v655, %v656
    %v660 = vsel %vm156, %v654, %v655
    %v661 = vsel %vm156, %v653, %v654
    %v662 = vsel %vm156, %v652, %v653
    %v663 = vsel %vm156, %v651, %v652
    %v664 = vsel %vm156, %v650, %v651
    %v665 = vsel %vm156, %v657, %v650
    %v666 = vmax.f32 %v642, %v664
    %v667 = vmax.f32 %v643, %v663
    %v668 = vmax.f32 %v644, %v662
    %v669 = vmax.f32 %v645, %v661
    %v670 = vmax.f32 %v646, %v660
    %v671 = vmax.f32 %v647, %v659
    %v672 = vmax.f32 %v648, %v658
    %v673 = vmax.f32 %v649, %v665
    %v674 = vrot.slane %v642, 2
    %v675 = vrot.slane %v643, 2
    %v676 = vrot.slane %v644, 2
    %v677 = vrot.slane %v645, 2
    %v678 = vrot.slane %v646, 2
    %v679 = vrot.slane %v647, 2
    %v680 = vrot.slane %v648, 2
    %v681 = vrot.slane %v649, 2
    %vm682 = vcmp.lt.s32.totalorder %v32, 6
    %v683 = vsel %vm682, %v680, %v681
    %v684 = vsel %vm682, %v679, %v680
    %v685 = vsel %vm682, %v678, %v679
    %v686 = vsel %vm682, %v677, %v678
    %v687 = vsel %vm682, %v676, %v677
    %v688 = vsel %vm682, %v675, %v676
    %v689 = vsel %vm682, %v674, %v675
    %v690 = vsel %vm682, %v681, %v674
    %v691 = vmax.f32 %v666, %v689
    %v692 = vmax.f32 %v667, %v688
    %v693 = vmax.f32 %v668, %v687
    %v694 = vmax.f32 %v669, %v686
    %v695 = vmax.f32 %v670, %v685
    %v696 = vmax.f32 %v671, %v684
    %v697 = vmax.f32 %v672, %v683
    %v698 = vmax.f32 %v673, %v690
    %vm699 = vcmask 97280
    %700 = vst.msk [vmem:[#allocation2] sm:$0xff] %vm699, %v691
    %701 = vst.msk [vmem:[#allocation2 + $0x8] sm:$0xff] %vm699, %v692
    %702 = vst.msk [vmem:[#allocation2 + $0x10] sm:$0xff] %vm699, %v693
    %703 = vst.msk [vmem:[#allocation2 + $0x18] sm:$0xff] %vm699, %v694
    %704 = vst.msk [vmem:[#allocation2 + $0x20] sm:$0xff] %vm699, %v695
    %705 = vst.msk [vmem:[#allocation2 + $0x28] sm:$0xff] %vm699, %v696
    %706 = vst.msk [vmem:[#allocation2 + $0x30] sm:$0xff] %vm699, %v697
    %707 = vst.msk [vmem:[#allocation2 + $0x38] sm:$0xff] %vm699, %v698
    %v708 = vld [vmem:[#allocation2] ss:$2 sm:$0xff]
    %s709 = scalar_lea.vmem [#allocation2], 16
    %v710 = vld [vmem:[%s709] ss:$2 sm:$0xff]
    %s711 = scalar_lea.vmem [#allocation2], 32
    %v712 = vld [vmem:[%s711] ss:$2 sm:$0xff]
    %s713 = scalar_lea.vmem [#allocation2], 48
    %v714 = vld [vmem:[%s713] ss:$2 sm:$0xff]
    %vm715 = vcmp.lt.s32.totalorder %v32, 0
    %v716 = vsub.s32 0, %v32
    %v717 = vsel %vm715, %v716, %v32
    %v718 = vshrl.u32 %v717, 4
    %v719 = vand.u32 %v717, 15
    %v720 = vsub.s32 0, %v719
    %v721 = vsel %vm715, %v720, %v719
    %vm722 = vcmp.lt.s32.totalorder %v264, 0
    %v723 = vsub.s32 0, %v264
    %v724 = vsel %vm722, %v723, %v264
    %v725 = vshrl.u32 %v724, 4
    %v726 = vand.u32 %v724, 15
    %v727 = vsub.s32 0, %v726
    %v728 = vsel %vm722, %v727, %v726
    %vm729 = vcmp.lt.s32.totalorder %v265, 0
    %v730 = vsub.s32 0, %v265
    %v731 = vsel %vm729, %v730, %v265
    %v732 = vshrl.u32 %v731, 4
    %v733 = vand.u32 %v731, 15
    %v734 = vsub.s32 0, %v733
    %v735 = vsel %vm729, %v734, %v733
    %vm736 = vcmp.lt.s32.totalorder %v266, 0
    %v737 = vsub.s32 0, %v266
    %v738 = vsel %vm736, %v737, %v266
    %v739 = vshrl.u32 %v738, 4
    %v740 = vand.u32 %v738, 15
    %v741 = vsub.s32 0, %v740
    %v742 = vsel %vm736, %v741, %v740
    %vm743 = vcmp.ne.s32.totalorder %v721, 0
    %vm744 = vcmp.ne.s32.totalorder %v728, 0
    %vm745 = vcmp.ne.s32.totalorder %v735, 0
    %vm746 = vcmp.ne.s32.totalorder %v742, 0
    %vm747 = vcmp.lt.s32.totalorder %v721, 0
    %vm748 = vcmp.lt.s32.totalorder %v728, 0
    %vm749 = vcmp.lt.s32.totalorder %v735, 0
    %vm750 = vcmp.lt.s32.totalorder %v742, 0
    %vm751 = vmand %vm747, %vm743
    %vm752 = vmand %vm748, %vm744
    %vm753 = vmand %vm749, %vm745
    %vm754 = vmand %vm750, %vm746
    %v755 = vadd.s32 %v721, 16
    %v756 = vadd.s32 %v728, 16
    %v757 = vadd.s32 %v735, 16
    %v758 = vadd.s32 %v742, 16
    %v759 = vsel %vm751, %v755, %v721
    %v760 = vsel %vm752, %v756, %v728
    %v761 = vsel %vm753, %v757, %v735
    %v762 = vsel %vm754, %v758, %v742
    %vm763 = vcmp.lt.s32.totalorder %v759, 8
    %vm764 = vcmp.lt.s32.totalorder %v760, 8
    %vm765 = vcmp.lt.s32.totalorder %v761, 8
    %vm766 = vcmp.lt.s32.totalorder %v762, 8
    %v767 = vsel %vm763, %v708, 0.0
    %v768 = vsel %vm764, %v710, 0.0
    %v769 = vsel %vm765, %v712, 0.0
    %v770 = vsel %vm766, %v714, 0.0
    %v771 = vrot.slane %v767, 7
    %v772 = vrot.slane %v768, 7
    %v773 = vrot.slane %v769, 7
    %v774 = vrot.slane %v770, 7
    %v775 = vsel %vm33, %v773, %v774
    %v776 = vsel %vm33, %v772, %v773
    %v777 = vsel %vm33, %v771, %v772
    %v778 = vsel %vm33, %v774, %v771
    %v779 = vld [vmem:[%s1 + $0x30] sm:$0xff]
    %v780 = vld [vmem:[%s1 + $0x38] sm:$0xf]
    %v781 = vld [vmem:[%s1 + $0x40] sm:$0xff]
    %v782 = vld [vmem:[%s1 + $0x48] sm:$0xf]
    %v784 = vsel %vm699, %v767, 0
    %v787 = vsel %vm699, %v768, 0
    %v790 = vsel %vm699, %v769, 0
    %v793 = vsel %vm699, %v770, 0
    %vm795 = vcmask 1043456
    %v797 = vsel %vm795, %v782, 0
    %799 = vmatpush.msra.mxu0 0.0
    %800 = vmatpush.msra.mxu0 0.0
    %801 = vmatpush.msra.mxu0 0.0
    %802 = vmatpush.msra.mxu0 0.0
    %803 = vmatpush.msra.mxu0 0.0
    %804 = vmatpush.msra.mxu0 0.0
    %805 = vmatpush.msra.mxu0 0.0
    %806 = vmatpush.msra.mxu0 0.0
    %807 = vmatpush.msra.mxu0 0.0
    %808 = vmatpush.msra.mxu0 0.0
    %809 = vmatpush.msra.mxu0 0.0
    %810 = vmatpush.msra.mxu0 0.0
    %811 = vmatpush.msra.mxu0 0.0
    %812 = vmatpush.msra.mxu0 0.0
    %813 = vmatpush.msra.mxu0 %v797
    %814 = vmatpush.msra.mxu0 %v781
    %815 = vmatmul.f32.gmra.mxu0 %v784
    %v816 = vpop.f32.mrf.mxu0
    %v817 = vadd.f32 0.0, %v816
    %818 = vmatmul.f32.gmra.mxu0 %v787
    %v819 = vpop.f32.mrf.mxu0
    %v820 = vadd.f32 0.0, %v819
    %821 = vmatmul.f32.gmra.mxu0 %v790
    %v822 = vpop.f32.mrf.mxu0
    %v823 = vadd.f32 0.0, %v822
    %824 = vmatmul.f32.gmra.mxu0 %v793
    %v825 = vpop.f32.mrf.mxu0
    %v826 = vadd.f32 0.0, %v825
    %827 = vdwg.mxu0
    %v829 = vsel %vm699, %v778, 0
    %v832 = vsel %vm699, %v777, 0
    %v835 = vsel %vm699, %v776, 0
    %v838 = vsel %vm699, %v775, 0
    %v841 = vsel %vm795, %v780, 0
    %843 = vmatpush.msra.mxu0 0.0
    %844 = vmatpush.msra.mxu0 0.0
    %845 = vmatpush.msra.mxu0 0.0
    %846 = vmatpush.msra.mxu0 0.0
    %847 = vmatpush.msra.mxu0 0.0
    %848 = vmatpush.msra.mxu0 0.0
    %849 = vmatpush.msra.mxu0 0.0
    %850 = vmatpush.msra.mxu0 0.0
    %851 = vmatpush.msra.mxu0 0.0
    %852 = vmatpush.msra.mxu0 0.0
    %853 = vmatpush.msra.mxu0 0.0
    %854 = vmatpush.msra.mxu0 0.0
    %855 = vmatpush.msra.mxu0 0.0
    %856 = vmatpush.msra.mxu0 0.0
    %857 = vmatpush.msra.mxu0 %v841
    %858 = vmatpush.msra.mxu0 %v779
    %859 = vmatmul.f32.gmra.mxu0 %v829
    %v860 = vpop.f32.mrf.mxu0
    %v861 = vadd.f32 %v817, %v860
    %862 = vmatmul.f32.gmra.mxu0 %v832
    %v863 = vpop.f32.mrf.mxu0
    %v864 = vadd.f32 %v820, %v863
    %865 = vmatmul.f32.gmra.mxu0 %v835
    %v866 = vpop.f32.mrf.mxu0
    %v867 = vadd.f32 %v823, %v866
    %868 = vmatmul.f32.gmra.mxu0 %v838
    %v869 = vpop.f32.mrf.mxu0
    %v870 = vadd.f32 %v826, %v869
    %871 = vdwg.mxu0
    %v872 = vrot.slane %v767, 1
    %v873 = vrot.slane %v768, 1
    %v874 = vrot.slane %v769, 1
    %v875 = vrot.slane %v770, 1
    %v876 = vsel %vm156, %v874, %v875
    %v877 = vsel %vm156, %v873, %v874
    %v878 = vsel %vm156, %v872, %v873
    %v879 = vsel %vm156, %v875, %v872
    %v880 = vld [vmem:[%s1 + $0x50] sm:$0xff]
    %v881 = vld [vmem:[%s1 + $0x58] sm:$0xf]
    %v883 = vsel %vm699, %v878, 0
    %v886 = vsel %vm699, %v877, 0
    %v889 = vsel %vm699, %v876, 0
    %v892 = vsel %vm699, %v879, 0
    %v895 = vsel %vm795, %v881, 0
    %897 = vmatpush.msra.mxu0 0.0
    %898 = vmatpush.msra.mxu0 0.0
    %899 = vmatpush.msra.mxu0 0.0
    %900 = vmatpush.msra.mxu0 0.0
    %901 = vmatpush.msra.mxu0 0.0
    %902 = vmatpush.msra.mxu0 0.0
    %903 = vmatpush.msra.mxu0 0.0
    %904 = vmatpush.msra.mxu0 0.0
    %905 = vmatpush.msra.mxu0 0.0
    %906 = vmatpush.msra.mxu0 0.0
    %907 = vmatpush.msra.mxu0 0.0
    %908 = vmatpush.msra.mxu0 0.0
    %909 = vmatpush.msra.mxu0 0.0
    %910 = vmatpush.msra.mxu0 0.0
    %911 = vmatpush.msra.mxu0 %v895
    %912 = vmatpush.msra.mxu0 %v880
    %913 = vmatmul.f32.gmra.mxu0 %v883
    %v914 = vpop.f32.mrf.mxu0
    %v915 = vadd.f32 0.0, %v914
    %916 = vmatmul.f32.gmra.mxu0 %v886
    %v917 = vpop.f32.mrf.mxu0
    %v918 = vadd.f32 0.0, %v917
    %919 = vmatmul.f32.gmra.mxu0 %v889
    %v920 = vpop.f32.mrf.mxu0
    %v921 = vadd.f32 0.0, %v920
    %922 = vmatmul.f32.gmra.mxu0 %v892
    %v923 = vpop.f32.mrf.mxu0
    %v924 = vadd.f32 0.0, %v923
    %925 = vdwg.mxu0
    %v926 = vadd.f32 %v861, %v915
    %v927 = vadd.f32 %v864, %v918
    %v928 = vadd.f32 %v867, %v921
    %v929 = vadd.f32 %v870, %v924
    %v930 = vld [vmem:[%s1 + $0x60] sm:$0x1]
    %v931 = vperm.slane %v930, 0
    %v932 = vadd.f32 %v926, %v931
    %v933 = vadd.f32 %v927, %v931
    %v934 = vadd.f32 %v928, %v931
    %v935 = vadd.f32 %v929, %v931
    %v936 = vmax.f32 %v932, 0.0
    %v937 = vmax.f32 %v933, 0.0
    %v938 = vmax.f32 %v934, 0.0
    %v939 = vmax.f32 %v935, 0.0
    %vm940 = vcmask 162816
    %941 = vst.msk [vmem:[#allocation3] sm:$0xff] %vm940, %v936
    %942 = vst.msk [vmem:[#allocation3 + $0x8] sm:$0xff] %vm940, %v937
    %943 = vst.msk [vmem:[#allocation3 + $0x10] sm:$0xff] %vm940, %v938
    %944 = vst.msk [vmem:[#allocation3 + $0x18] sm:$0xff] %vm940, %v939
    %v945 = vld [vmem:[#allocation3] ss:$16 sm:$0x3]
    %s946 = scalar_lea.vmem [#allocation3], 1
    %v947 = vld [vmem:[%s946] ss:$16 sm:$0x3]
    %v948 = vmax.f32 %v945, %v947
    %v949 = vld [vmem:[%s1 + $0x68] sm:$0xff]
    %v950 = vld [vmem:[%s1 + $0x70] sm:$0xff]
    %v951 = vld [vmem:[%s1 + $0x78] sm:$0xf]
    %s952 = scalar_lea.vmem [#allocation3], 2
    %v953 = vld [vmem:[%s952] ss:$16 sm:$0x3]
    %s954 = scalar_lea.vmem [#allocation3], 3
    %v955 = vld [vmem:[%s954] ss:$16 sm:$0x3]
    %v956 = vmax.f32 %v953, %v955
    %v957 = vld [vmem:[%s1 + $0x80] sm:$0xff]
    %v958 = vld [vmem:[%s1 + $0x88] sm:$0xff]
    %v959 = vld [vmem:[%s1 + $0x90] sm:$0xf]
    %v961 = vsel %vm940, %v956, 0
    %v964 = vsel %vm795, %v959, 0
    %966 = vmatpush.msra.mxu0 0.0
    %967 = vmatpush.msra.mxu0 0.0
    %968 = vmatpush.msra.mxu0 0.0
    %969 = vmatpush.msra.mxu0 0.0
    %970 = vmatpush.msra.mxu0 0.0
    %971 = vmatpush.msra.mxu0 0.0
    %972 = vmatpush.msra.mxu0 0.0
    %973 = vmatpush.msra.mxu0 0.0
    %974 = vmatpush.msra.mxu0 0.0
    %975 = vmatpush.msra.mxu0 0.0
    %976 = vmatpush.msra.mxu0 0.0
    %977 = vmatpush.msra.mxu0 0.0
    %978 = vmatpush.msra.mxu0 0.0
    %979 = vmatpush.msra.mxu0 %v964
    %980 = vmatpush.msra.mxu0 %v958
    %981 = vmatpush.msra.mxu0 %v957
    %982 = vmatmul.f32.gmra.mxu0 %v961
    %v983 = vpop.f32.mrf.mxu0
    %v984 = vadd.f32 0.0, %v983
    %985 = vdwg.mxu0
    %v987 = vsel %vm940, %v948, 0
    %v990 = vsel %vm795, %v951, 0
    %992 = vmatpush.msra.mxu0 0.0
    %993 = vmatpush.msra.mxu0 0.0
    %994 = vmatpush.msra.mxu0 0.0
    %995 = vmatpush.msra.mxu0 0.0
    %996 = vmatpush.msra.mxu0 0.0
    %997 = vmatpush.msra.mxu0 0.0
    %998 = vmatpush.msra.mxu0 0.0
    %999 = vmatpush.msra.mxu0 0.0
    %1000 = vmatpush.msra.mxu0 0.0
    %1001 = vmatpush.msra.mxu0 0.0
    %1002 = vmatpush.msra.mxu0 0.0
    %1003 = vmatpush.msra.mxu0 0.0
    %1004 = vmatpush.msra.mxu0 0.0
    %1005 = vmatpush.msra.mxu0 %v990
    %1006 = vmatpush.msra.mxu0 %v950
    %1007 = vmatpush.msra.mxu0 %v949
    %1008 = vmatmul.f32.gmra.mxu0 %v987
    %v1009 = vpop.f32.mrf.mxu0
    %v1010 = vadd.f32 %v984, %v1009
    %1011 = vdwg.mxu0
    %s1012 = scalar_lea.vmem [#allocation3], 4
    %v1013 = vld [vmem:[%s1012] ss:$16 sm:$0x3]
    %s1014 = scalar_lea.vmem [#allocation3], 5
    %v1015 = vld [vmem:[%s1014] ss:$16 sm:$0x3]
    %v1016 = vmax.f32 %v1013, %v1015
    %v1017 = vld [vmem:[%s1 + $0x98] sm:$0xff]
    %v1018 = vld [vmem:[%s1 + $0xa0] sm:$0xff]
    %v1019 = vld [vmem:[%s1 + $0xa8] sm:$0xf]
    %v1021 = vsel %vm940, %v1016, 0
    %v1024 = vsel %vm795, %v1019, 0
    %1026 = vmatpush.msra.mxu0 0.0
    %1027 = vmatpush.msra.mxu0 0.0
    %1028 = vmatpush.msra.mxu0 0.0
    %1029 = vmatpush.msra.mxu0 0.0
    %1030 = vmatpush.msra.mxu0 0.0
    %1031 = vmatpush.msra.mxu0 0.0
    %1032 = vmatpush.msra.mxu0 0.0
    %1033 = vmatpush.msra.mxu0 0.0
    %1034 = vmatpush.msra.mxu0 0.0
    %1035 = vmatpush.msra.mxu0 0.0
    %1036 = vmatpush.msra.mxu0 0.0
    %1037 = vmatpush.msra.mxu0 0.0
    %1038 = vmatpush.msra.mxu0 0.0
    %1039 = vmatpush.msra.mxu0 %v1024
    %1040 = vmatpush.msra.mxu0 %v1018
    %1041 = vmatpush.msra.mxu0 %v1017
    %1042 = vmatmul.f32.gmra.mxu0 %v1021
    %v1043 = vpop.f32.mrf.mxu0
    %v1044 = vadd.f32 0.0, %v1043
    %1045 = vdwg.mxu0
    %v1046 = vadd.f32 %v1010, %v1044
    %s1047 = scalar_lea.vmem [#allocation3], 6
    %v1048 = vld [vmem:[%s1047] ss:$16 sm:$0x3]
    %s1049 = scalar_lea.vmem [#allocation3], 7
    %v1050 = vld [vmem:[%s1049] ss:$16 sm:$0x3]
    %v1051 = vmax.f32 %v1048, %v1050
    %v1052 = vld [vmem:[%s1 + $0xb0] sm:$0xff]
    %v1053 = vld [vmem:[%s1 + $0xb8] sm:$0xff]
    %v1054 = vld [vmem:[%s1 + $0xc0] sm:$0xf]
    %v1056 = vsel %vm940, %v1051, 0
    %v1059 = vsel %vm795, %v1054, 0
    %1061 = vmatpush.msra.mxu0 0.0
    %1062 = vmatpush.msra.mxu0 0.0
    %1063 = vmatpush.msra.mxu0 0.0
    %1064 = vmatpush.msra.mxu0 0.0
    %1065 = vmatpush.msra.mxu0 0.0
    %1066 = vmatpush.msra.mxu0 0.0
    %1067 = vmatpush.msra.mxu0 0.0
    %1068 = vmatpush.msra.mxu0 0.0
    %1069 = vmatpush.msra.mxu0 0.0
    %1070 = vmatpush.msra.mxu0 0.0
    %1071 = vmatpush.msra.mxu0 0.0
    %1072 = vmatpush.msra.mxu0 0.0
    %1073 = vmatpush.msra.mxu0 0.0
    %1074 = vmatpush.msra.mxu0 %v1059
    %1075 = vmatpush.msra.mxu0 %v1053
    %1076 = vmatpush.msra.mxu0 %v1052
    %1077 = vmatmul.f32.gmra.mxu0 %v1056
    %v1078 = vpop.f32.mrf.mxu0
    %v1079 = vadd.f32 0.0, %v1078
    %1080 = vdwg.mxu0
    %v1081 = vadd.f32 %v1046, %v1079
    %v1082 = vld [vmem:[%s1 + $0xc8] sm:$0x1]
    %v1083 = vperm.slane %v1082, 0
    %v1084 = vadd.f32 %v1081, %v1083
    %v1085 = vmax.f32 %v1084, 0.0
    %v1086 = vld [vmem:[%s1 + $0xd0] sm:$0xff]
    %v1087 = vld [vmem:[%s1 + $0xd8] sm:$0xff]
    %v1088 = vld [vmem:[%s1 + $0xe0] sm:$0xff]
    %v1089 = vld [vmem:[%s1 + $0xe8] sm:$0xff]
    %v1090 = vld [vmem:[%s1 + $0xf0] sm:$0xff]
    %v1091 = vld [vmem:[%s1 + $0xf8] sm:$0xff]
    %v1092 = vld [vmem:[%s1 + $0x100] sm:$0xff]
    %v1093 = vld [vmem:[%s1 + $0x108] sm:$0xf]
    %v1094 = vld [vmem:[%s1 + $0x110] sm:$0x1]
    %v1095 = vperm.slane %v1094, 0
    %vm1096 = vcmask 490496
    %v1098 = vsel %vm1096, %v1085, 0
    %v1101 = vsel %vm795, %v1093, 0
    %1103 = vmatpush.msra.mxu0 0.0
    %1104 = vmatpush.msra.mxu0 0.0
    %1105 = vmatpush.msra.mxu0 0.0
    %1106 = vmatpush.msra.mxu0 0.0
    %1107 = vmatpush.msra.mxu0 0.0
    %1108 = vmatpush.msra.mxu0 0.0
    %1109 = vmatpush.msra.mxu0 0.0
    %1110 = vmatpush.msra.mxu0 0.0
    %1111 = vmatpush.msra.mxu0 %v1101
    %1112 = vmatpush.msra.mxu0 %v1092
    %1113 = vmatpush.msra.mxu0 %v1091
    %1114 = vmatpush.msra.mxu0 %v1090
    %1115 = vmatpush.msra.mxu0 %v1089
    %1116 = vmatpush.msra.mxu0 %v1088
    %1117 = vmatpush.msra.mxu0 %v1087
    %1118 = vmatpush.msra.mxu0 %v1086
    %1119 = vmatmul.f32.gmra.mxu0 %v1098
    %v1120 = vpop.f32.mrf.mxu0
    %v1121 = vadd.f32 %v1095, %v1120
    %1122 = vdwg.mxu0
    %v1123 = vmax.f32 %v1121, 0.0
    %v1124 = vld [vmem:[%s1 + $0x118] sm:$0xff]
    %v1125 = vld [vmem:[%s1 + $0x120] sm:$0xff]
    %v1126 = vld [vmem:[%s1 + $0x128] sm:$0xff]
    %v1127 = vld [vmem:[%s1 + $0x130] sm:$0xff]
    %v1128 = vld [vmem:[%s1 + $0x138] sm:$0xff]
    %v1129 = vld [vmem:[%s1 + $0x140] sm:$0xff]
    %v1130 = vld [vmem:[%s1 + $0x148] sm:$0x3]
    %v1131 = vld [vmem:[%s1 + $0x150] sm:$0x1]
    %v1132 = vperm.slane %v1131, 0
    %vm1133 = vcmask 408576
    %v1135 = vsel %vm1133, %v1123, 0
    %vm1137 = vcmask 1041408
    %v1139 = vsel %vm1137, %v1130, 0
    %1141 = vmatpush.msra.mxu0 0.0
    %1142 = vmatpush.msra.mxu0 0.0
    %1143 = vmatpush.msra.mxu0 0.0
    %1144 = vmatpush.msra.mxu0 0.0
    %1145 = vmatpush.msra.mxu0 0.0
    %1146 = vmatpush.msra.mxu0 0.0
    %1147 = vmatpush.msra.mxu0 0.0
    %1148 = vmatpush.msra.mxu0 0.0
    %1149 = vmatpush.msra.mxu0 0.0
    %1150 = vmatpush.msra.mxu0 %v1139
    %1151 = vmatpush.msra.mxu0 %v1129
    %1152 = vmatpush.msra.mxu0 %v1128
    %1153 = vmatpush.msra.mxu0 %v1127
    %1154 = vmatpush.msra.mxu0 %v1126
    %1155 = vmatpush.msra.mxu0 %v1125
    %1156 = vmatpush.msra.mxu0 %v1124
    %1157 = vmatmul.f32.gmra.mxu0 %v1135
    %v1158 = vpop.f32.mrf.mxu0
    %v1159 = vadd.f32 %v1132, %v1158
    %1160 = vdwg.mxu0
    %v1161 = vmax.f32 %v1159, 0.0
    %v1162 = vld [vmem:[%s1 + $0x158] sm:$0xff]
    %v1163 = vld [vmem:[%s1 + $0x160] sm:$0xff]
    %v1164 = vld [vmem:[%s1 + $0x168] sm:$0xff]
    %v1165 = vld [vmem:[%s1 + $0x170] sm:$0x1]
    %v1166 = vld [vmem:[%s1 + $0x178] sm:$0x1]
    %v1167 = vperm.slane %v1166, 0
    %vm1168 = vcmask 203776
    %v1170 = vsel %vm1168, %v1161, 0
    %vm1172 = vcmask 1040384
    %v1174 = vsel %vm1172, %v1165, 0
    %1176 = vmatpush.msra.mxu0 0.0
    %1177 = vmatpush.msra.mxu0 0.0
    %1178 = vmatpush.msra.mxu0 0.0
    %1179 = vmatpush.msra.mxu0 0.0
    %1180 = vmatpush.msra.mxu0 0.0
    %1181 = vmatpush.msra.mxu0 0.0
    %1182 = vmatpush.msra.mxu0 0.0
    %1183 = vmatpush.msra.mxu0 0.0
    %1184 = vmatpush.msra.mxu0 0.0
    %1185 = vmatpush.msra.mxu0 0.0
    %1186 = vmatpush.msra.mxu0 0.0
    %1187 = vmatpush.msra.mxu0 0.0
    %1188 = vmatpush.msra.mxu0 %v1174
    %1189 = vmatpush.msra.mxu0 %v1164
    %1190 = vmatpush.msra.mxu0 %v1163
    %1191 = vmatpush.msra.mxu0 %v1162
    %1192 = vmatmul.f32.gmra.mxu0 %v1170
    %v1193 = vpop.f32.mrf.mxu0
    %v1194 = vadd.f32 %v1167, %v1193
    %1195 = vdwg.mxu0
    %vm1196 = vcmask 17408
    %1197 = vst.msk [vmem:[#allocation4] sm:$0x3] %vm1196, %v1194
    // Predicated region
    $region10: #{cnn_forward_pallas.1} parent=1 // pred_check
      _
    $region11: #{cnn_forward_pallas.1} parent=1 // pred_check_branch
      %1199 = sbr.rel (0) target = $region13
    $region12: #{cnn_forward_pallas.1} parent=1 // pred_region
      %1201 = vsyncadd [#allocation5], 0
      %s1203 = sshll.u32 [#allocation4], 4
      %s1204 = int_to_ptr.vmem [resolvable:$true] %s1203
      %s1205 = sshll.u32 %s2, 4
      %s1206 = int_to_ptr.hbm [resolvable:$true] %s1205
      %1208 = dma.vmem_to_hbm [thread:$0]  %s1204, 32, %s1206, [#allocation5]
    $region13: #{cnn_forward_pallas.1} parent=1 // pred_fallthru
      _
    // Predicated region
    $region14: #{cnn_forward_pallas.1} parent=1 // pred_check
      _
    $region15: #{cnn_forward_pallas.1} parent=1 // pred_check_branch
      %1210 = sbr.rel (0) target = $region17
    $region16: #{cnn_forward_pallas.1} parent=1 // pred_region
      %1212 = dma.done [#allocation5], 32
    $region17: #{cnn_forward_pallas.1} parent=1 // pred_fallthru
      _
    %1213 = vsyncpa [#allocation5], 1

</llo_original>
